<compile_context>
chip_gen: v5e
topology: v5e:2x2
jax: 0.10.0
libtpu: 0.0.40
codegen_flags: <defaults>
</compile_context>

<pallas_src>
import functools
from collections import namedtuple

import jax
import jax.numpy as jnp
from jax.experimental import pallas as pl
from jax.experimental.pallas import tpu as pltpu

LossTuple = namedtuple(
    "LossTuple",
    ["rpn_loc_loss", "rpn_cls_loss", "roi_loc_loss", "roi_cls_loss", "total_loss"],
)

_VMEM_SPEC = pl.BlockSpec(memory_space=pltpu.MemorySpace.VMEM)
_C = 128          # lane width of every slab chunk and of the output row
_NEG = -1e30      # logit padding value (keeps logsumexp unchanged)


# ----------------------------------------------------------------------------
# In-kernel helpers (traced inside the fused kernel body)
# ----------------------------------------------------------------------------
def _smooth_l1_sum(diff, sigma2):
    abs_diff = jnp.abs(diff)
    flag = (abs_diff < (1.0 / sigma2)).astype(jnp.float32)
    y = flag * (0.5 * sigma2) * diff * diff + (1.0 - flag) * (abs_diff - 0.5 / sigma2)
    return jnp.sum(y)


def _log_softmax_lanes(scores):
    # scores: (N, 128) f32, padded lanes hold _NEG so they contribute exp(..)=0.
    m = jnp.max(scores, axis=-1, keepdims=True)
    z = scores - m
    lse = jnp.log(jnp.sum(jnp.exp(z), axis=-1, keepdims=True))
    return z - lse


# ----------------------------------------------------------------------------
# Fused loss kernel: 2 lane-dense slabs -> one lane-dense (1, 128) output row
#
# Slab layout (per row, 4 chunks of 128 lanes each):
#   [0:128)   prediction  (rpn_loc / roi_cls_loc), zero padded
#   [128:256) ground-truth loc (gt_rpn_loc / class-tiled gt_roi_loc), zero padded
#   [256:384) class scores (rpn_score / roi_score), padded with -1e30
#   [384:512) ground-truth label broadcast across all 128 lanes (f32)
# ----------------------------------------------------------------------------
def _fused_loss_kernel(rpn_ref, roi_ref, out_ref, *, rpn_sigma, roi_sigma):
    f32 = jnp.float32

    # ---------------- RPN losses ---------------------------------------------
    rpn_pred = rpn_ref[:, 0 * _C:1 * _C]
    rpn_gt   = rpn_ref[:, 1 * _C:2 * _C]
    rpn_sc   = rpn_ref[:, 2 * _C:3 * _C]
    rpn_lab  = rpn_ref[:, 3 * _C:4 * _C]          # label replicated across lanes

    na = rpn_pred.shape[0]
    rpn_valid = (rpn_lab >= 0.0).astype(f32)      # per-row constant across lanes
    rpn_pos   = (rpn_lab > 0.0).astype(f32)
    # labels are replicated over all 128 lanes -> divide by _C for the row count
    # (exact: 128*k < 2^24).  Labels live in {-1,0,1}, so (>=0) == (!=-1) and one
    # reduction serves both the smooth-L1 and the cross-entropy denominators.
    n_valid = jnp.sum(rpn_valid) * (1.0 / _C)

    # smooth L1: padded lanes are 0 - 0 = 0 and contribute exactly 0
    rpn_diff = (rpn_pred - rpn_gt) * rpn_pos
    rpn_loc_sum = _smooth_l1_sum(rpn_diff, rpn_sigma * rpn_sigma)

    lane_r = jax.lax.broadcasted_iota(jnp.int32, (na, _C), 1)
    rpn_logp = _log_softmax_lanes(rpn_sc)
    rpn_onehot = (lane_r == rpn_lab.astype(jnp.int32)).astype(f32)  # -1 never matches
    rpn_ce_sum = -jnp.sum(rpn_onehot * rpn_valid * rpn_logp)

    inv_valid = 1.0 / n_valid                     # exact div (1e-4 tolerance kept)
    rpn_loc_loss = rpn_loc_sum * inv_valid
    rpn_cls_loss = rpn_ce_sum * inv_valid

    # ---------------- ROI losses ---------------------------------------------
    roi_pred = roi_ref[:, 0 * _C:1 * _C]
    roi_gt   = roi_ref[:, 1 * _C:2 * _C]          # gt_roi_loc pre-tiled per class
    roi_sc   = roi_ref[:, 2 * _C:3 * _C]
    roi_lab  = roi_ref[:, 3 * _C:4 * _C]

    ns = roi_pred.shape[0]
    lane_s = jax.lax.broadcasted_iota(jnp.int32, (ns, _C), 1)
    roi_lab_i = roi_lab.astype(jnp.int32)

    # fused gate: select the 4 coords of the gt class AND require label > 0
    sel_pos = jnp.logical_and((lane_s >> 2) == roi_lab_i, roi_lab_i > 0).astype(f32)
    roi_diff = (roi_pred - roi_gt) * sel_pos
    roi_loc_sum = _smooth_l1_sum(roi_diff, roi_sigma * roi_sigma)

    roi_logp = _log_softmax_lanes(roi_sc)
    roi_onehot = (lane_s == roi_lab_i).astype(f32)
    roi_ce_sum = -jnp.sum(roi_onehot * roi_logp)

    # ROI labels are never negative -> both denominators are the constant n_sample
    inv_ns = 1.0 / ns
    roi_loc_loss = roi_loc_sum * inv_ns
    roi_cls_loss = roi_ce_sum * inv_ns

    total = rpn_loc_loss + rpn_cls_loss + roi_loc_loss + roi_cls_loss

    # ---- pack the 5 scalars into one lane-dense (1, 128) output row ---------
    lane_o = jax.lax.broadcasted_iota(jnp.int32, (1, _C), 1)
    row = (jnp.where(lane_o == 0, rpn_loc_loss, 0.0)
           + jnp.where(lane_o == 1, rpn_cls_loss, 0.0)
           + jnp.where(lane_o == 2, roi_loc_loss, 0.0)
           + jnp.where(lane_o == 3, roi_cls_loss, 0.0)
           + jnp.where(lane_o == 4, total, 0.0))
    out_ref[...] = row.astype(f32)


# ----------------------------------------------------------------------------
# Wrapper: slab construction (layout plumbing) + single pallas_call
# ----------------------------------------------------------------------------
def _build_rpn_slab(rpn_loc, rpn_score, gt_rpn_loc, gt_rpn_label):
    f32 = jnp.float32
    na = rpn_loc.shape[0]
    c_pred = jnp.pad(rpn_loc.astype(f32), ((0, 0), (0, _C - rpn_loc.shape[1])))
    c_gt = jnp.pad(gt_rpn_loc.astype(f32), ((0, 0), (0, _C - gt_rpn_loc.shape[1])))
    c_sc = jnp.pad(rpn_score.astype(f32), ((0, 0), (0, _C - rpn_score.shape[1])),
                   constant_values=_NEG)
    c_lab = jnp.broadcast_to(gt_rpn_label.astype(f32).reshape(na, 1), (na, _C))
    return jnp.concatenate([c_pred, c_gt, c_sc, c_lab], axis=1)


def _build_roi_slab(roi_cls_loc, roi_score, gt_roi_loc, gt_roi_label):
    f32 = jnp.float32
    ns, w = roi_cls_loc.shape
    n_class = w // 4
    c_pred = jnp.pad(roi_cls_loc.astype(f32), ((0, 0), (0, _C - w)))
    # pre-tile gt_roi_loc to match the (class-major, coord-minor) cls_loc layout
    c_gt = jnp.pad(jnp.tile(gt_roi_loc.astype(f32), (1, n_class)),
                   ((0, 0), (0, _C - w)))
    c_sc = jnp.pad(roi_score.astype(f32), ((0, 0), (0, _C - roi_score.shape[1])),
                   constant_values=_NEG)
    c_lab = jnp.broadcast_to(gt_roi_label.astype(f32).reshape(ns, 1), (ns, _C))
    return jnp.concatenate([c_pred, c_gt, c_sc, c_lab], axis=1)


@functools.partial(jax.jit, static_argnames=("rpn_sigma", "roi_sigma"))
def fused_loss_row(rpn_loc, rpn_score, gt_rpn_loc, gt_rpn_label,
                   roi_cls_loc, roi_score, gt_roi_loc, gt_roi_label,
                   *, rpn_sigma, roi_sigma):
    if roi_cls_loc.shape[1] > _C or roi_score.shape[1] > _C or rpn_score.shape[1] > _C:
        raise ValueError("class axes must fit in a single 128-lane chunk")

    rpn_slab = _build_rpn_slab(rpn_loc, rpn_score, gt_rpn_loc, gt_rpn_label)
    roi_slab = _build_roi_slab(roi_cls_loc, roi_score, gt_roi_loc, gt_roi_label)

    # Advisory cost estimate so XLA schedules this tiny kernel sensibly next to
    # the heavy extractor/RPN/head conv workload.
    n_elems = int(rpn_slab.size + roi_slab.size)
    cost = pl.CostEstimate(
        flops=int(24 * n_elems),
        transcendentals=int(2 * (rpn_slab.shape[0] + roi_slab.shape[0]) * _C),
        bytes_accessed=int(4 * (n_elems + _C)),
    )

    out = pl.pallas_call(
        functools.partial(_fused_loss_kernel,
                          rpn_sigma=float(rpn_sigma), roi_sigma=float(roi_sigma)),
        out_shape=jax.ShapeDtypeStruct((1, _C), jnp.float32),
        in_specs=[_VMEM_SPEC, _VMEM_SPEC],
        out_specs=_VMEM_SPEC,
        cost_estimate=cost,
    )(rpn_slab, roi_slab)

    # single post-kernel op: [rpn_loc, rpn_cls, roi_loc, roi_cls, total]
    return out[0, :5]


# ----------------------------------------------------------------------------
# Trainer wrapper (loss part of FasterRCNNTrainer.forward)
# ----------------------------------------------------------------------------
class FasterRCNNTrainerPallas:
    def __init__(self, rpn_sigma=3.0, roi_sigma=1.0, n_class=21):
        self.rpn_sigma = float(rpn_sigma)
        self.roi_sigma = float(roi_sigma)
        self.n_class = n_class

    def loss_row(self, imgs, bboxes, labels, scale, detector_outputs):
        """Device-side (5,) row: [rpn_loc, rpn_cls, roi_loc, roi_cls, total]."""
        n = bboxes.shape[0]
        if n != 1:
            raise ValueError("Currently only batch size 1 is supported.")
        # TODO(synk): faster_rcnn.extractor / .rpn / .head and the
        # Anchor/ProposalTargetCreator (numpy NMS + IoU matching) are external
        # sub-modules; their outputs arrive pre-computed in `detector_outputs`.
        (rpn_loc, rpn_score, gt_rpn_loc, gt_rpn_label,
         roi_cls_loc, roi_score, gt_roi_loc, gt_roi_label) = detector_outputs
        return fused_loss_row(rpn_loc, rpn_score, gt_rpn_loc, gt_rpn_label,
                              roi_cls_loc, roi_score, gt_roi_loc, gt_roi_label,
                              rpn_sigma=self.rpn_sigma, roi_sigma=self.roi_sigma)

    def forward(self, imgs, bboxes, labels, scale, detector_outputs):
        row = self.loss_row(imgs, bboxes, labels, scale, detector_outputs)
        # ONE host transfer; avoids five per-scalar gather/dispatch ops.
        vals = jax.device_get(row)
        return LossTuple(*(float(v) for v in vals))


# ----------------------------------------------------------------------------
# Plain-JAX reference for verification
# ----------------------------------------------------------------------------
def _reference_losses(rpn_loc, rpn_score, gt_rpn_loc, gt_rpn_label,
                      roi_cls_loc, roi_score, gt_roi_loc, gt_roi_label,
                      rpn_sigma, roi_sigma):
    def smooth_l1(pred, gt, label, sigma):
        sigma2 = sigma * sigma
        w = (label > 0).astype(jnp.float32)[:, None]
        diff = w * (pred - gt)
        ad = jnp.abs(diff)
        flag = (ad < 1.0 / sigma2).astype(jnp.float32)
        y = flag * (sigma2 / 2.0) * diff * diff + (1.0 - flag) * (ad - 0.5 / sigma2)
        return jnp.sum(y) / jnp.sum((label >= 0).astype(jnp.float32))

    def ce(scores, label, ignore_index=-1):
        logp = jax.nn.log_softmax(scores, axis=-1)
        valid = (label != ignore_index)
        safe = jnp.where(valid, label, 0)
        picked = jnp.take_along_axis(logp, safe[:, None], axis=1)[:, 0]
        return -jnp.sum(picked * valid.astype(jnp.float32)) / jnp.sum(valid.astype(jnp.float32))

    n_sample = roi_cls_loc.shape[0]
    n_class = roi_cls_loc.shape[1] // 4
    cls_loc_3d = roi_cls_loc.reshape(n_sample, n_class, 4)
    roi_loc = jnp.take_along_axis(
        cls_loc_3d, gt_roi_label[:, None, None].astype(jnp.int32), axis=1)[:, 0, :]

    l1 = smooth_l1(rpn_loc, gt_rpn_loc, gt_rpn_label, rpn_sigma)
    l2 = ce(rpn_score, gt_rpn_label, -1)
    l3 = smooth_l1(roi_loc, gt_roi_loc, gt_roi_label, roi_sigma)
    l4 = ce(roi_score, gt_roi_label, -1)
    return LossTuple(l1, l2, l3, l4, l1 + l2 + l3 + l4)


if __name__ == "__main__":
    key = jax.random.PRNGKey(0)
    ks = jax.random.split(key, 10)

    # Module-level inputs (batch size 1, as required by the forward).
    B, C_img, H, W = 1, 3, 16, 16
    imgs = jax.random.normal(ks[0], (B, C_img, H, W), dtype=jnp.float32)   # NCHW
    bboxes = jax.random.uniform(ks[1], (B, 2, 4), dtype=jnp.float32) * H
    labels = jax.random.randint(ks[2], (B, 2), 0, 20)
    scale = 1.0

    # Synthesized detector / target-creator outputs (deterministic).
    feat_h, feat_w, n_anchor_per_loc = 4, 4, 9
    n_anchor = feat_h * feat_w * n_anchor_per_loc        # 144
    n_sample, n_class = 128, 21

    rpn_loc = jax.random.normal(ks[3], (n_anchor, 4), dtype=jnp.float32)
    rpn_score = jax.random.normal(ks[4], (n_anchor, 2), dtype=jnp.float32)
    gt_rpn_loc = jax.random.normal(ks[5], (n_anchor, 4), dtype=jnp.float32)
    gt_rpn_label = jax.random.randint(ks[6], (n_anchor,), -1, 2)           # {-1,0,1}

    roi_cls_loc = jax.random.normal(ks[7], (n_sample, n_class * 4), dtype=jnp.float32)
    roi_score = jax.random.normal(ks[8], (n_sample, n_class), dtype=jnp.float32)
    gt_roi_loc = jax.random.normal(ks[9], (n_sample, 4), dtype=jnp.float32)
    gt_roi_label = jax.random.randint(jax.random.fold_in(key, 99), (n_sample,), 0, n_class)

    detector_outputs = (rpn_loc, rpn_score, gt_rpn_loc, gt_rpn_label,
                        roi_cls_loc, roi_score, gt_roi_loc, gt_roi_label)

    trainer = FasterRCNNTrainerPallas(rpn_sigma=3.0, roi_sigma=1.0, n_class=n_class)

    # Device-side row (the training hot path consumes this, e.g. row[4] = total).
    row = trainer.loss_row(imgs, bboxes, labels, scale, detector_outputs)
    row = jax.block_until_ready(row)

    ref = _reference_losses(*detector_outputs, rpn_sigma=3.0, roi_sigma=1.0)
    ref_row = jnp.stack([ref.rpn_loc_loss, ref.rpn_cls_loss,
                         ref.roi_loc_loss, ref.roi_cls_loss, ref.total_loss])
    assert jnp.allclose(row, ref_row, rtol=1e-4, atol=1e-4), (row, ref_row)

    # Host-facing LossTuple (single device_get, no per-scalar dispatches).
    losses = trainer.forward(imgs, bboxes, labels, scale, detector_outputs)
    for got, want in zip(losses, ref):
        w = float(want)
        assert abs(float(got) - w) <= 1e-4 + 1e-4 * abs(w), (got, w)

    print("KERNEL_OK")
</pallas_src>

<mosaic_0001>
module attributes {stable_mosaic.version = 11 : i64} {
  func.func @_fused_loss_kernel(%arg0: memref<144x512xf32, #tpu.memory_space<vmem>>, %arg1: memref<128x512xf32, #tpu.memory_space<vmem>>, %arg2: memref<1x128xf32, #tpu.memory_space<vmem>>) attributes {dimension_semantics = [], scalar_prefetch = 0 : i64, scratch_operands = 0 : i64, tpu.core_type = #tpu.core_type<tc>} {
    %c0 = arith.constant 0 : index
    %c0_0 = arith.constant 0 : index
    %0 = vector.load %arg0[%c0, %c0_0] : memref<144x512xf32, #tpu.memory_space<vmem>>, vector<144x128xf32>
    %c0_1 = arith.constant 0 : index
    %c128 = arith.constant 128 : index
    %1 = vector.load %arg0[%c0_1, %c128] : memref<144x512xf32, #tpu.memory_space<vmem>>, vector<144x128xf32>
    %c0_2 = arith.constant 0 : index
    %c256 = arith.constant 256 : index
    %2 = vector.load %arg0[%c0_2, %c256] : memref<144x512xf32, #tpu.memory_space<vmem>>, vector<144x128xf32>
    %c0_3 = arith.constant 0 : index
    %c384 = arith.constant 384 : index
    %3 = vector.load %arg0[%c0_3, %c384] : memref<144x512xf32, #tpu.memory_space<vmem>>, vector<144x128xf32>
    %cst = arith.constant 0.000000e+00 : f32
    %4 = vector.broadcast %cst : f32 to vector<144x128xf32>
    %5 = arith.cmpf oge, %3, %4 : vector<144x128xf32>
    %6 = arith.extui %5 : vector<144x128xi1> to vector<144x128xi32>
    %7 = arith.sitofp %6 : vector<144x128xi32> to vector<144x128xf32>
    %cst_4 = arith.constant 0.000000e+00 : f32
    %8 = vector.broadcast %cst_4 : f32 to vector<144x128xf32>
    %9 = arith.cmpf ogt, %3, %8 : vector<144x128xf32>
    %10 = arith.extui %9 : vector<144x128xi1> to vector<144x128xi32>
    %11 = arith.sitofp %10 : vector<144x128xi32> to vector<144x128xf32>
    %12 = vector.shape_cast %7 : vector<144x128xf32> to vector<1x144x128xf32>
    %cst_5 = arith.constant dense<0.000000e+00> : vector<1xf32>
    %13 = vector.multi_reduction <add>, %12, %cst_5 [1, 2] : vector<1x144x128xf32> to vector<1xf32>
    %14 = vector.shape_cast %13 : vector<1xf32> to vector<1x1x1xf32>
    %15 = vector.extract %14[0, 0, 0] : f32 from vector<1x1x1xf32>
    %cst_6 = arith.constant 7.812500e-03 : f32
    %16 = arith.mulf %15, %cst_6 : f32
    %17 = arith.subf %0, %1 : vector<144x128xf32>
    %18 = arith.mulf %17, %11 : vector<144x128xf32>
    %19 = math.absf %18 : vector<144x128xf32>
    %cst_7 = arith.constant 0.111111112 : f32
    %20 = vector.broadcast %cst_7 : f32 to vector<144x128xf32>
    %21 = arith.cmpf olt, %19, %20 : vector<144x128xf32>
    %22 = arith.extui %21 : vector<144x128xi1> to vector<144x128xi32>
    %23 = arith.sitofp %22 : vector<144x128xi32> to vector<144x128xf32>
    %cst_8 = arith.constant 4.500000e+00 : f32
    %24 = vector.broadcast %cst_8 : f32 to vector<144x128xf32>
    %25 = arith.mulf %23, %24 : vector<144x128xf32>
    %26 = arith.mulf %25, %18 : vector<144x128xf32>
    %27 = arith.mulf %26, %18 : vector<144x128xf32>
    %cst_9 = arith.constant 1.000000e+00 : f32
    %28 = vector.broadcast %cst_9 : f32 to vector<144x128xf32>
    %29 = arith.subf %28, %23 : vector<144x128xf32>
    %cst_10 = arith.constant 0.055555556 : f32
    %30 = vector.broadcast %cst_10 : f32 to vector<144x128xf32>
    %31 = arith.subf %19, %30 : vector<144x128xf32>
    %32 = arith.mulf %29, %31 : vector<144x128xf32>
    %33 = arith.addf %27, %32 : vector<144x128xf32>
    %34 = vector.shape_cast %33 : vector<144x128xf32> to vector<1x144x128xf32>
    %cst_11 = arith.constant dense<0.000000e+00> : vector<1xf32>
    %35 = vector.multi_reduction <add>, %34, %cst_11 [1, 2] : vector<1x144x128xf32> to vector<1xf32>
    %36 = vector.shape_cast %35 : vector<1xf32> to vector<1x1x1xf32>
    %37 = vector.extract %36[0, 0, 0] : f32 from vector<1x1x1xf32>
    %38 = tpu.iota {dimensions = array<i32: 1>} : vector<144x128xi32>
    %cst_12 = arith.constant dense<0xFF800000> : vector<144xf32>
    %39 = vector.multi_reduction <maximumf>, %2, %cst_12 [1] : vector<144x128xf32> to vector<144xf32>
    %40 = vector.shape_cast %39 : vector<144xf32> to vector<144x1xf32>
    %41 = vector.broadcast %40 : vector<144x1xf32> to vector<144x128xf32>
    %42 = arith.subf %2, %41 : vector<144x128xf32>
    %43 = math.exp %42 : vector<144x128xf32>
    %cst_13 = arith.constant dense<0.000000e+00> : vector<144xf32>
    %44 = vector.multi_reduction <add>, %43, %cst_13 [1] : vector<144x128xf32> to vector<144xf32>
    %45 = vector.shape_cast %44 : vector<144xf32> to vector<144x1xf32>
    %46 = math.log %45 : vector<144x1xf32>
    %47 = vector.broadcast %46 : vector<144x1xf32> to vector<144x128xf32>
    %48 = arith.subf %42, %47 : vector<144x128xf32>
    %49 = arith.fptosi %3 : vector<144x128xf32> to vector<144x128xi32>
    %50 = arith.cmpi eq, %38, %49 : vector<144x128xi32>
    %51 = arith.extui %50 : vector<144x128xi1> to vector<144x128xi32>
    %52 = arith.sitofp %51 : vector<144x128xi32> to vector<144x128xf32>
    %53 = arith.mulf %52, %7 : vector<144x128xf32>
    %54 = arith.mulf %53, %48 : vector<144x128xf32>
    %55 = vector.shape_cast %54 : vector<144x128xf32> to vector<1x144x128xf32>
    %cst_14 = arith.constant dense<0.000000e+00> : vector<1xf32>
    %56 = vector.multi_reduction <add>, %55, %cst_14 [1, 2] : vector<1x144x128xf32> to vector<1xf32>
    %57 = vector.shape_cast %56 : vector<1xf32> to vector<1x1x1xf32>
    %58 = vector.extract %57[0, 0, 0] : f32 from vector<1x1x1xf32>
    %cst_15 = arith.constant 0.000000e+00 : f32
    %59 = arith.subf %cst_15, %58 : f32
    %cst_16 = arith.constant 1.000000e+00 : f32
    %60 = arith.divf %cst_16, %16 : f32
    %61 = arith.mulf %37, %60 : f32
    %62 = arith.mulf %59, %60 : f32
    %c0_17 = arith.constant 0 : index
    %c0_18 = arith.constant 0 : index
    %63 = vector.load %arg1[%c0_17, %c0_18] : memref<128x512xf32, #tpu.memory_space<vmem>>, vector<128x128xf32>
    %c0_19 = arith.constant 0 : index
    %c128_20 = arith.constant 128 : index
    %64 = vector.load %arg1[%c0_19, %c128_20] : memref<128x512xf32, #tpu.memory_space<vmem>>, vector<128x128xf32>
    %c0_21 = arith.constant 0 : index
    %c256_22 = arith.constant 256 : index
    %65 = vector.load %arg1[%c0_21, %c256_22] : memref<128x512xf32, #tpu.memory_space<vmem>>, vector<128x128xf32>
    %c0_23 = arith.constant 0 : index
    %c384_24 = arith.constant 384 : index
    %66 = vector.load %arg1[%c0_23, %c384_24] : memref<128x512xf32, #tpu.memory_space<vmem>>, vector<128x128xf32>
    %67 = tpu.iota {dimensions = array<i32: 1>} : vector<128x128xi32>
    %68 = arith.fptosi %66 : vector<128x128xf32> to vector<128x128xi32>
    %c2_i32 = arith.constant 2 : i32
    %69 = vector.broadcast %c2_i32 : i32 to vector<128x128xi32>
    %70 = arith.shrsi %67, %69 : vector<128x128xi32>
    %71 = arith.cmpi eq, %70, %68 : vector<128x128xi32>
    %c0_i32 = arith.constant 0 : i32
    %72 = vector.broadcast %c0_i32 : i32 to vector<128x128xi32>
    %73 = arith.cmpi sgt, %68, %72 : vector<128x128xi32>
    %74 = arith.andi %71, %73 : vector<128x128xi1>
    %75 = arith.extui %74 : vector<128x128xi1> to vector<128x128xi32>
    %76 = arith.sitofp %75 : vector<128x128xi32> to vector<128x128xf32>
    %77 = arith.subf %63, %64 : vector<128x128xf32>
    %78 = arith.mulf %77, %76 : vector<128x128xf32>
    %79 = math.absf %78 : vector<128x128xf32>
    %cst_25 = arith.constant 1.000000e+00 : f32
    %80 = vector.broadcast %cst_25 : f32 to vector<128x128xf32>
    %81 = arith.cmpf olt, %79, %80 : vector<128x128xf32>
    %82 = arith.extui %81 : vector<128x128xi1> to vector<128x128xi32>
    %83 = arith.sitofp %82 : vector<128x128xi32> to vector<128x128xf32>
    %cst_26 = arith.constant 5.000000e-01 : f32
    %84 = vector.broadcast %cst_26 : f32 to vector<128x128xf32>
    %85 = arith.mulf %83, %84 : vector<128x128xf32>
    %86 = arith.mulf %85, %78 : vector<128x128xf32>
    %87 = arith.mulf %86, %78 : vector<128x128xf32>
    %cst_27 = arith.constant 1.000000e+00 : f32
    %88 = vector.broadcast %cst_27 : f32 to vector<128x128xf32>
    %89 = arith.subf %88, %83 : vector<128x128xf32>
    %cst_28 = arith.constant 5.000000e-01 : f32
    %90 = vector.broadcast %cst_28 : f32 to vector<128x128xf32>
    %91 = arith.subf %79, %90 : vector<128x128xf32>
    %92 = arith.mulf %89, %91 : vector<128x128xf32>
    %93 = arith.addf %87, %92 : vector<128x128xf32>
    %94 = vector.shape_cast %93 : vector<128x128xf32> to vector<1x128x128xf32>
    %cst_29 = arith.constant dense<0.000000e+00> : vector<1xf32>
    %95 = vector.multi_reduction <add>, %94, %cst_29 [1, 2] : vector<1x128x128xf32> to vector<1xf32>
    %96 = vector.shape_cast %95 : vector<1xf32> to vector<1x1x1xf32>
    %97 = vector.extract %96[0, 0, 0] : f32 from vector<1x1x1xf32>
    %cst_30 = arith.constant dense<0xFF800000> : vector<128xf32>
    %98 = vector.multi_reduction <maximumf>, %65, %cst_30 [1] : vector<128x128xf32> to vector<128xf32>
    %99 = vector.shape_cast %98 : vector<128xf32> to vector<128x1xf32>
    %100 = vector.broadcast %99 : vector<128x1xf32> to vector<128x128xf32>
    %101 = arith.subf %65, %100 : vector<128x128xf32>
    %102 = math.exp %101 : vector<128x128xf32>
    %cst_31 = arith.constant dense<0.000000e+00> : vector<128xf32>
    %103 = vector.multi_reduction <add>, %102, %cst_31 [1] : vector<128x128xf32> to vector<128xf32>
    %104 = vector.shape_cast %103 : vector<128xf32> to vector<128x1xf32>
    %105 = math.log %104 : vector<128x1xf32>
    %106 = vector.broadcast %105 : vector<128x1xf32> to vector<128x128xf32>
    %107 = arith.subf %101, %106 : vector<128x128xf32>
    %108 = arith.cmpi eq, %67, %68 : vector<128x128xi32>
    %109 = arith.extui %108 : vector<128x128xi1> to vector<128x128xi32>
    %110 = arith.sitofp %109 : vector<128x128xi32> to vector<128x128xf32>
    %111 = arith.mulf %110, %107 : vector<128x128xf32>
    %112 = vector.shape_cast %111 : vector<128x128xf32> to vector<1x128x128xf32>
    %cst_32 = arith.constant dense<0.000000e+00> : vector<1xf32>
    %113 = vector.multi_reduction <add>, %112, %cst_32 [1, 2] : vector<1x128x128xf32> to vector<1xf32>
    %114 = vector.shape_cast %113 : vector<1xf32> to vector<1x1x1xf32>
    %115 = vector.extract %114[0, 0, 0] : f32 from vector<1x1x1xf32>
    %cst_33 = arith.constant 0.000000e+00 : f32
    %116 = arith.subf %cst_33, %115 : f32
    %cst_34 = arith.constant 7.812500e-03 : f32
    %117 = arith.mulf %97, %cst_34 : f32
    %cst_35 = arith.constant 7.812500e-03 : f32
    %118 = arith.mulf %116, %cst_35 : f32
    %119 = arith.addf %61, %62 : f32
    %120 = arith.addf %119, %117 : f32
    %121 = arith.addf %120, %118 : f32
    %122 = tpu.iota {dimensions = array<i32: 1>} : vector<1x128xi32>
    %c0_i32_36 = arith.constant 0 : i32
    %123 = vector.broadcast %c0_i32_36 : i32 to vector<1x128xi32>
    %124 = arith.cmpi eq, %122, %123 : vector<1x128xi32>
    %cst_37 = arith.constant 0.000000e+00 : f32
    %125 = vector.broadcast %61 : f32 to vector<1x128xf32>
    %126 = vector.broadcast %cst_37 : f32 to vector<1x128xf32>
    %127 = arith.select %124, %125, %126 : vector<1x128xi1>, vector<1x128xf32>
    %c1_i32 = arith.constant 1 : i32
    %128 = vector.broadcast %c1_i32 : i32 to vector<1x128xi32>
    %129 = arith.cmpi eq, %122, %128 : vector<1x128xi32>
    %cst_38 = arith.constant 0.000000e+00 : f32
    %130 = vector.broadcast %62 : f32 to vector<1x128xf32>
    %131 = vector.broadcast %cst_38 : f32 to vector<1x128xf32>
    %132 = arith.select %129, %130, %131 : vector<1x128xi1>, vector<1x128xf32>
    %133 = arith.addf %127, %132 : vector<1x128xf32>
    %c2_i32_39 = arith.constant 2 : i32
    %134 = vector.broadcast %c2_i32_39 : i32 to vector<1x128xi32>
    %135 = arith.cmpi eq, %122, %134 : vector<1x128xi32>
    %cst_40 = arith.constant 0.000000e+00 : f32
    %136 = vector.broadcast %117 : f32 to vector<1x128xf32>
    %137 = vector.broadcast %cst_40 : f32 to vector<1x128xf32>
    %138 = arith.select %135, %136, %137 : vector<1x128xi1>, vector<1x128xf32>
    %139 = arith.addf %133, %138 : vector<1x128xf32>
    %c3_i32 = arith.constant 3 : i32
    %140 = vector.broadcast %c3_i32 : i32 to vector<1x128xi32>
    %141 = arith.cmpi eq, %122, %140 : vector<1x128xi32>
    %cst_41 = arith.constant 0.000000e+00 : f32
    %142 = vector.broadcast %118 : f32 to vector<1x128xf32>
    %143 = vector.broadcast %cst_41 : f32 to vector<1x128xf32>
    %144 = arith.select %141, %142, %143 : vector<1x128xi1>, vector<1x128xf32>
    %145 = arith.addf %139, %144 : vector<1x128xf32>
    %c4_i32 = arith.constant 4 : i32
    %146 = vector.broadcast %c4_i32 : i32 to vector<1x128xi32>
    %147 = arith.cmpi eq, %122, %146 : vector<1x128xi32>
    %cst_42 = arith.constant 0.000000e+00 : f32
    %148 = vector.broadcast %121 : f32 to vector<1x128xf32>
    %149 = vector.broadcast %cst_42 : f32 to vector<1x128xf32>
    %150 = arith.select %147, %148, %149 : vector<1x128xi1>, vector<1x128xf32>
    %151 = arith.addf %145, %150 : vector<1x128xf32>
    %c0_43 = arith.constant 0 : index
    %c0_44 = arith.constant 0 : index
    %152 = vector.load %arg2[%c0_43, %c0_44] : memref<1x128xf32, #tpu.memory_space<vmem>>, vector<1x128xf32>
    tpu.vector_store %arg2[%c0_43, %c0_44], %151 {strides = array<i32>} : memref<1x128xf32, #tpu.memory_space<vmem>>, vector<1x128xf32>,
    return
  }
}

</mosaic_0001>

<llo_original>
// kernel: tile.9
$region0: #{tile.9}
  %s0 = inlined_call_operand.vmem [shape: f32[128,21,4], index: 0, kind: input, shape index: {}]
  %s1 = inlined_call_operand.vmem [shape: f32[128,84], index: 1, kind: output, shape index: {}]
  $region1: #{tile.9} parent=0
    #allocation0 [shape = 'u8[86016]{0}', space=vmem, size = 0x15000, scoped, tag = 'scoped mem for input reshape']
    %s3 = ssub.s32 16, 1
    %s4 = scalar_lea.vmem %s0, 80
    %v5 = vld [vmem:[%s4] sm:%s3]
    %s6 = scalar_lea.vmem [#allocation0], 160
    %7 = vst [vmem:[%s6] sm:%s3] %v5
    %s8 = scalar_lea.vmem %s0, 76
    %v9 = vld [vmem:[%s8] sm:%s3]
    %s10 = scalar_lea.vmem [#allocation0], 152
    %11 = vst [vmem:[%s10] sm:%s3] %v9
    %s12 = scalar_lea.vmem %s0, 72
    %v13 = vld [vmem:[%s12] sm:%s3]
    %s14 = scalar_lea.vmem [#allocation0], 144
    %15 = vst [vmem:[%s14] sm:%s3] %v13
    %s16 = scalar_lea.vmem %s0, 68
    %v17 = vld [vmem:[%s16] sm:%s3]
    %s18 = scalar_lea.vmem [#allocation0], 136
    %19 = vst [vmem:[%s18] sm:%s3] %v17
    %s20 = scalar_lea.vmem %s0, 64
    %v21 = vld [vmem:[%s20] sm:%s3]
    %s22 = scalar_lea.vmem [#allocation0], 128
    %23 = vst [vmem:[%s22] sm:%s3] %v21
    %s24 = scalar_lea.vmem %s0, 60
    %v25 = vld [vmem:[%s24] sm:%s3]
    %s26 = scalar_lea.vmem [#allocation0], 120
    %27 = vst [vmem:[%s26] sm:%s3] %v25
    %s28 = scalar_lea.vmem %s0, 56
    %v29 = vld [vmem:[%s28] sm:%s3]
    %s30 = scalar_lea.vmem [#allocation0], 112
    %31 = vst [vmem:[%s30] sm:%s3] %v29
    %s32 = scalar_lea.vmem %s0, 52
    %v33 = vld [vmem:[%s32] sm:%s3]
    %s34 = scalar_lea.vmem [#allocation0], 104
    %35 = vst [vmem:[%s34] sm:%s3] %v33
    %s36 = scalar_lea.vmem %s0, 48
    %v37 = vld [vmem:[%s36] sm:%s3]
    %s38 = scalar_lea.vmem [#allocation0], 96
    %39 = vst [vmem:[%s38] sm:%s3] %v37
    %s40 = scalar_lea.vmem %s0, 44
    %v41 = vld [vmem:[%s40] sm:%s3]
    %s42 = scalar_lea.vmem [#allocation0], 88
    %43 = vst [vmem:[%s42] sm:%s3] %v41
    %s44 = scalar_lea.vmem %s0, 40
    %v45 = vld [vmem:[%s44] sm:%s3]
    %s46 = scalar_lea.vmem [#allocation0], 80
    %47 = vst [vmem:[%s46] sm:%s3] %v45
    %s48 = scalar_lea.vmem %s0, 36
    %v49 = vld [vmem:[%s48] sm:%s3]
    %s50 = scalar_lea.vmem [#allocation0], 72
    %51 = vst [vmem:[%s50] sm:%s3] %v49
    %s52 = scalar_lea.vmem %s0, 32
    %v53 = vld [vmem:[%s52] sm:%s3]
    %s54 = scalar_lea.vmem [#allocation0], 64
    %55 = vst [vmem:[%s54] sm:%s3] %v53
    %s56 = scalar_lea.vmem %s0, 28
    %v57 = vld [vmem:[%s56] sm:%s3]
    %s58 = scalar_lea.vmem [#allocation0], 56
    %59 = vst [vmem:[%s58] sm:%s3] %v57
    %s60 = scalar_lea.vmem %s0, 24
    %v61 = vld [vmem:[%s60] sm:%s3]
    %s62 = scalar_lea.vmem [#allocation0], 48
    %63 = vst [vmem:[%s62] sm:%s3] %v61
    %s64 = scalar_lea.vmem %s0, 20
    %v65 = vld [vmem:[%s64] sm:%s3]
    %s66 = scalar_lea.vmem [#allocation0], 40
    %67 = vst [vmem:[%s66] sm:%s3] %v65
    %s68 = scalar_lea.vmem %s0, 16
    %v69 = vld [vmem:[%s68] sm:%s3]
    %s70 = scalar_lea.vmem [#allocation0], 32
    %71 = vst [vmem:[%s70] sm:%s3] %v69
    %s72 = scalar_lea.vmem %s0, 12
    %v73 = vld [vmem:[%s72] sm:%s3]
    %s74 = scalar_lea.vmem [#allocation0], 24
    %75 = vst [vmem:[%s74] sm:%s3] %v73
    %s76 = scalar_lea.vmem %s0, 8
    %v77 = vld [vmem:[%s76] sm:%s3]
    %s78 = scalar_lea.vmem [#allocation0], 16
    %79 = vst [vmem:[%s78] sm:%s3] %v77
    %s80 = scalar_lea.vmem %s0, 4
    %v81 = vld [vmem:[%s80] sm:%s3]
    %s82 = scalar_lea.vmem [#allocation0], 8
    %83 = vst [vmem:[%s82] sm:%s3] %v81
    %v84 = vld [vmem:[%s0] sm:%s3]
    %85 = vst [vmem:[#allocation0] sm:%s3] %v84
    %v86 = vld [vmem:[#allocation0] sm:$0xf]
    %87 = vst [vmem:[%s1] sm:$0xf] %v86
    %s88 = scalar_lea.vmem [#allocation0], 8
    %v89 = vld [vmem:[%s88] sm:$0xf]
    %s90 = scalar_lea.vmem %s1, 4
    %91 = vst [vmem:[%s90] sm:$0xf] %v89
    %s92 = scalar_lea.vmem [#allocation0], 16
    %v93 = vld [vmem:[%s92] sm:$0xf]
    %s94 = scalar_lea.vmem %s1, 8
    %95 = vst [vmem:[%s94] sm:$0xf] %v93
    %s96 = scalar_lea.vmem [#allocation0], 24
    %v97 = vld [vmem:[%s96] sm:$0xf]
    %s98 = scalar_lea.vmem %s1, 12
    %99 = vst [vmem:[%s98] sm:$0xf] %v97
    %s100 = scalar_lea.vmem [#allocation0], 32
    %v101 = vld [vmem:[%s100] sm:$0xf]
    %s102 = scalar_lea.vmem %s1, 16
    %103 = vst [vmem:[%s102] sm:$0xf] %v101
    %s104 = scalar_lea.vmem [#allocation0], 40
    %v105 = vld [vmem:[%s104] sm:$0xf]
    %s106 = scalar_lea.vmem %s1, 20
    %107 = vst [vmem:[%s106] sm:$0xf] %v105
    %s108 = scalar_lea.vmem [#allocation0], 48
    %v109 = vld [vmem:[%s108] sm:$0xf]
    %s110 = scalar_lea.vmem %s1, 24
    %111 = vst [vmem:[%s110] sm:$0xf] %v109
    %s112 = scalar_lea.vmem [#allocation0], 56
    %v113 = vld [vmem:[%s112] sm:$0xf]
    %s114 = scalar_lea.vmem %s1, 28
    %115 = vst [vmem:[%s114] sm:$0xf] %v113
    %s116 = scalar_lea.vmem [#allocation0], 64
    %v117 = vld [vmem:[%s116] sm:$0xf]
    %s118 = scalar_lea.vmem %s1, 32
    %119 = vst [vmem:[%s118] sm:$0xf] %v117
    %s120 = scalar_lea.vmem [#allocation0], 72
    %v121 = vld [vmem:[%s120] sm:$0xf]
    %s122 = scalar_lea.vmem %s1, 36
    %123 = vst [vmem:[%s122] sm:$0xf] %v121
    %s124 = scalar_lea.vmem [#allocation0], 80
    %v125 = vld [vmem:[%s124] sm:$0xf]
    %s126 = scalar_lea.vmem %s1, 40
    %127 = vst [vmem:[%s126] sm:$0xf] %v125
    %s128 = scalar_lea.vmem [#allocation0], 88
    %v129 = vld [vmem:[%s128] sm:$0xf]
    %s130 = scalar_lea.vmem %s1, 44
    %131 = vst [vmem:[%s130] sm:$0xf] %v129
    %s132 = scalar_lea.vmem [#allocation0], 96
    %v133 = vld [vmem:[%s132] sm:$0xf]
    %s134 = scalar_lea.vmem %s1, 48
    %135 = vst [vmem:[%s134] sm:$0xf] %v133
    %s136 = scalar_lea.vmem [#allocation0], 104
    %v137 = vld [vmem:[%s136] sm:$0xf]
    %s138 = scalar_lea.vmem %s1, 52
    %139 = vst [vmem:[%s138] sm:$0xf] %v137
    %s140 = scalar_lea.vmem [#allocation0], 112
    %v141 = vld [vmem:[%s140] sm:$0xf]
    %s142 = scalar_lea.vmem %s1, 56
    %143 = vst [vmem:[%s142] sm:$0xf] %v141
    %s144 = scalar_lea.vmem [#allocation0], 120
    %v145 = vld [vmem:[%s144] sm:$0xf]
    %s146 = scalar_lea.vmem %s1, 60
    %147 = vst [vmem:[%s146] sm:$0xf] %v145
    %s148 = scalar_lea.vmem [#allocation0], 128
    %v149 = vld [vmem:[%s148] sm:$0xf]
    %s150 = scalar_lea.vmem %s1, 64
    %151 = vst [vmem:[%s150] sm:$0xf] %v149
    %s152 = scalar_lea.vmem [#allocation0], 136
    %v153 = vld [vmem:[%s152] sm:$0xf]
    %s154 = scalar_lea.vmem %s1, 68
    %155 = vst [vmem:[%s154] sm:$0xf] %v153
    %s156 = scalar_lea.vmem [#allocation0], 144
    %v157 = vld [vmem:[%s156] sm:$0xf]
    %s158 = scalar_lea.vmem %s1, 72
    %159 = vst [vmem:[%s158] sm:$0xf] %v157
    %s160 = scalar_lea.vmem [#allocation0], 152
    %v161 = vld [vmem:[%s160] sm:$0xf]
    %s162 = scalar_lea.vmem %s1, 76
    %163 = vst [vmem:[%s162] sm:$0xf] %v161
    %s164 = scalar_lea.vmem [#allocation0], 160
    %v165 = vld [vmem:[%s164] sm:$0xf]
    %s166 = scalar_lea.vmem %s1, 80
    %167 = vst [vmem:[%s166] sm:$0xf] %v165

// kernel: fused_loss_row.1
$region0: #{fused_loss_row.1}
  #allocation0 [shape = 'u32[]', space=smem, size = 0x4, offset = 0x4, fixed_abs, tag = 'smem constant byte address 0x4 - core index']
  #allocation1 [shape = 'u32[72,128]{1,0:T(1,128)}', space=vmem, size = 0x9000, scoped, tag = 'internal scratch']
  %s0 = inlined_call_operand.vmem [shape: f32[144,512], index: 0, kind: input, shape index: {}]
  %s1 = inlined_call_operand.vmem [shape: f32[128,512], index: 1, kind: input, shape index: {}]
  %s2 = inlined_call_operand.vmem [shape: f32[1,128], index: 2, kind: output, shape index: {}]
  %s3 = sld [smem:[#allocation0]]
  $region18: #{fused_loss_row.1} parent=0
    _
  %s5 = ssub.s32 1, %s3
  %s6 = scalar_select 0, %s5, %s3
  // Predicated region
  $region2: #{fused_loss_row.1} parent=0 // pred_check
    _
  $region3: #{fused_loss_row.1} parent=0 // pred_check_branch
    %8 = sbr.rel (0) target = $region5
  $region4: #{fused_loss_row.1} parent=0 // pred_region
    _
  $region5: #{fused_loss_row.1} parent=0 // pred_fallthru
    _
  // Predicated region
  $region6: #{fused_loss_row.1} parent=0 // pred_check
    _
  $region7: #{fused_loss_row.1} parent=0 // pred_check_branch
    %10 = sbr.rel (0) target = $region9
  $region8: #{fused_loss_row.1} parent=0 // pred_region
    _
  $region9: #{fused_loss_row.1} parent=0 // pred_fallthru
    _
  %v11 = vld [vmem:[%s0] sm:$0xff]
  %v12 = vld [vmem:[%s0 + $0x20] sm:$0xff]
  %v13 = vld [vmem:[%s0 + $0x40] sm:$0xff]
  %v14 = vld [vmem:[%s0 + $0x60] sm:$0xff]
  %v15 = vld [vmem:[%s0 + $0x80] sm:$0xff]
  %v16 = vld [vmem:[%s0 + $0xa0] sm:$0xff]
  %v17 = vld [vmem:[%s0 + $0xc0] sm:$0xff]
  %v18 = vld [vmem:[%s0 + $0xe0] sm:$0xff]
  %v19 = vld [vmem:[%s0 + $0x100] sm:$0xff]
  %v20 = vld [vmem:[%s0 + $0x120] sm:$0xff]
  %v21 = vld [vmem:[%s0 + $0x140] sm:$0xff]
  %v22 = vld [vmem:[%s0 + $0x160] sm:$0xff]
  %v23 = vld [vmem:[%s0 + $0x180] sm:$0xff]
  %v24 = vld [vmem:[%s0 + $0x1a0] sm:$0xff]
  %v25 = vld [vmem:[%s0 + $0x1c0] sm:$0xff]
  %v26 = vld [vmem:[%s0 + $0x1e0] sm:$0xff]
  %v27 = vld [vmem:[%s0 + $0x200] sm:$0xff]
  %v28 = vld [vmem:[%s0 + $0x220] sm:$0xff]
  %v29 = vld [vmem:[%s0 + $0x8] sm:$0xff]
  %v30 = vld [vmem:[%s0 + $0x28] sm:$0xff]
  %v31 = vld [vmem:[%s0 + $0x48] sm:$0xff]
  %v32 = vld [vmem:[%s0 + $0x68] sm:$0xff]
  %v33 = vld [vmem:[%s0 + $0x88] sm:$0xff]
  %v34 = vld [vmem:[%s0 + $0xa8] sm:$0xff]
  %v35 = vld [vmem:[%s0 + $0xc8] sm:$0xff]
  %v36 = vld [vmem:[%s0 + $0xe8] sm:$0xff]
  %v37 = vld [vmem:[%s0 + $0x108] sm:$0xff]
  %v38 = vld [vmem:[%s0 + $0x128] sm:$0xff]
  %v39 = vld [vmem:[%s0 + $0x148] sm:$0xff]
  %v40 = vld [vmem:[%s0 + $0x168] sm:$0xff]
  %v41 = vld [vmem:[%s0 + $0x188] sm:$0xff]
  %v42 = vld [vmem:[%s0 + $0x1a8] sm:$0xff]
  %v43 = vld [vmem:[%s0 + $0x1c8] sm:$0xff]
  %v44 = vld [vmem:[%s0 + $0x1e8] sm:$0xff]
  %v45 = vld [vmem:[%s0 + $0x208] sm:$0xff]
  %v46 = vld [vmem:[%s0 + $0x228] sm:$0xff]
  %v47 = vld [vmem:[%s0 + $0x10] sm:$0xff]
  %v48 = vld [vmem:[%s0 + $0x30] sm:$0xff]
  %v49 = vld [vmem:[%s0 + $0x50] sm:$0xff]
  %v50 = vld [vmem:[%s0 + $0x70] sm:$0xff]
  %v51 = vld [vmem:[%s0 + $0x90] sm:$0xff]
  %v52 = vld [vmem:[%s0 + $0xb0] sm:$0xff]
  %v53 = vld [vmem:[%s0 + $0xd0] sm:$0xff]
  %v54 = vld [vmem:[%s0 + $0xf0] sm:$0xff]
  %v55 = vld [vmem:[%s0 + $0x110] sm:$0xff]
  %v56 = vld [vmem:[%s0 + $0x130] sm:$0xff]
  %v57 = vld [vmem:[%s0 + $0x150] sm:$0xff]
  %v58 = vld [vmem:[%s0 + $0x170] sm:$0xff]
  %v59 = vld [vmem:[%s0 + $0x190] sm:$0xff]
  %v60 = vld [vmem:[%s0 + $0x1b0] sm:$0xff]
  %v61 = vld [vmem:[%s0 + $0x1d0] sm:$0xff]
  %v62 = vld [vmem:[%s0 + $0x1f0] sm:$0xff]
  %v63 = vld [vmem:[%s0 + $0x210] sm:$0xff]
  %v64 = vld [vmem:[%s0 + $0x230] sm:$0xff]
  %v65 = vld [vmem:[%s0 + $0x18] sm:$0xff]
  %v66 = vld [vmem:[%s0 + $0x38] sm:$0xff]
  %v67 = vld [vmem:[%s0 + $0x58] sm:$0xff]
  %v68 = vld [vmem:[%s0 + $0x78] sm:$0xff]
  %v69 = vld [vmem:[%s0 + $0x98] sm:$0xff]
  %v70 = vld [vmem:[%s0 + $0xb8] sm:$0xff]
  %v71 = vld [vmem:[%s0 + $0xd8] sm:$0xff]
  %v72 = vld [vmem:[%s0 + $0xf8] sm:$0xff]
  %v73 = vld [vmem:[%s0 + $0x118] sm:$0xff]
  %v74 = vld [vmem:[%s0 + $0x138] sm:$0xff]
  %v75 = vld [vmem:[%s0 + $0x158] sm:$0xff]
  %v76 = vld [vmem:[%s0 + $0x178] sm:$0xff]
  %v77 = vld [vmem:[%s0 + $0x198] sm:$0xff]
  %v78 = vld [vmem:[%s0 + $0x1b8] sm:$0xff]
  %v79 = vld [vmem:[%s0 + $0x1d8] sm:$0xff]
  %v80 = vld [vmem:[%s0 + $0x1f8] sm:$0xff]
  %v81 = vld [vmem:[%s0 + $0x218] sm:$0xff]
  %v82 = vld [vmem:[%s0 + $0x238] sm:$0xff]
  %vm83 = vcmp.ge.f32.partialorder %v65, 0.0
  %vm84 = vcmp.ge.f32.partialorder %v66, 0.0
  %vm85 = vcmp.ge.f32.partialorder %v67, 0.0
  %vm86 = vcmp.ge.f32.partialorder %v68, 0.0
  %vm87 = vcmp.ge.f32.partialorder %v69, 0.0
  %vm88 = vcmp.ge.f32.partialorder %v70, 0.0
  %vm89 = vcmp.ge.f32.partialorder %v71, 0.0
  %vm90 = vcmp.ge.f32.partialorder %v72, 0.0
  %vm91 = vcmp.ge.f32.partialorder %v73, 0.0
  %vm92 = vcmp.ge.f32.partialorder %v74, 0.0
  %vm93 = vcmp.ge.f32.partialorder %v75, 0.0
  %vm94 = vcmp.ge.f32.partialorder %v76, 0.0
  %vm95 = vcmp.ge.f32.partialorder %v77, 0.0
  %vm96 = vcmp.ge.f32.partialorder %v78, 0.0
  %vm97 = vcmp.ge.f32.partialorder %v79, 0.0
  %vm98 = vcmp.ge.f32.partialorder %v80, 0.0
  %vm99 = vcmp.ge.f32.partialorder %v81, 0.0
  %vm100 = vcmp.ge.f32.partialorder %v82, 0.0
  %v101 = vsel %vm83, 1, 0
  %v102 = vsel %vm84, 1, 0
  %v103 = vsel %vm85, 1, 0
  %v104 = vsel %vm86, 1, 0
  %v105 = vsel %vm87, 1, 0
  %v106 = vsel %vm88, 1, 0
  %v107 = vsel %vm89, 1, 0
  %v108 = vsel %vm90, 1, 0
  %v109 = vsel %vm91, 1, 0
  %v110 = vsel %vm92, 1, 0
  %v111 = vsel %vm93, 1, 0
  %v112 = vsel %vm94, 1, 0
  %v113 = vsel %vm95, 1, 0
  %v114 = vsel %vm96, 1, 0
  %v115 = vsel %vm97, 1, 0
  %v116 = vsel %vm98, 1, 0
  %v117 = vsel %vm99, 1, 0
  %v118 = vsel %vm100, 1, 0
  %v119 = vcvt.s32.f32 %v101
  %v120 = vcvt.s32.f32 %v102
  %v121 = vcvt.s32.f32 %v103
  %v122 = vcvt.s32.f32 %v104
  %v123 = vcvt.s32.f32 %v105
  %v124 = vcvt.s32.f32 %v106
  %v125 = vcvt.s32.f32 %v107
  %v126 = vcvt.s32.f32 %v108
  %v127 = vcvt.s32.f32 %v109
  %v128 = vcvt.s32.f32 %v110
  %v129 = vcvt.s32.f32 %v111
  %v130 = vcvt.s32.f32 %v112
  %v131 = vcvt.s32.f32 %v113
  %v132 = vcvt.s32.f32 %v114
  %v133 = vcvt.s32.f32 %v115
  %v134 = vcvt.s32.f32 %v116
  %v135 = vcvt.s32.f32 %v117
  %v136 = vcvt.s32.f32 %v118
  %vm137 = vcmp.gt.f32.partialorder %v65, 0.0
  %vm138 = vcmp.gt.f32.partialorder %v66, 0.0
  %vm139 = vcmp.gt.f32.partialorder %v67, 0.0
  %vm140 = vcmp.gt.f32.partialorder %v68, 0.0
  %vm141 = vcmp.gt.f32.partialorder %v69, 0.0
  %vm142 = vcmp.gt.f32.partialorder %v70, 0.0
  %vm143 = vcmp.gt.f32.partialorder %v71, 0.0
  %vm144 = vcmp.gt.f32.partialorder %v72, 0.0
  %vm145 = vcmp.gt.f32.partialorder %v73, 0.0
  %vm146 = vcmp.gt.f32.partialorder %v74, 0.0
  %vm147 = vcmp.gt.f32.partialorder %v75, 0.0
  %vm148 = vcmp.gt.f32.partialorder %v76, 0.0
  %vm149 = vcmp.gt.f32.partialorder %v77, 0.0
  %vm150 = vcmp.gt.f32.partialorder %v78, 0.0
  %vm151 = vcmp.gt.f32.partialorder %v79, 0.0
  %vm152 = vcmp.gt.f32.partialorder %v80, 0.0
  %vm153 = vcmp.gt.f32.partialorder %v81, 0.0
  %vm154 = vcmp.gt.f32.partialorder %v82, 0.0
  %v155 = vsel %vm137, 1, 0
  %v156 = vsel %vm138, 1, 0
  %v157 = vsel %vm139, 1, 0
  %v158 = vsel %vm140, 1, 0
  %v159 = vsel %vm141, 1, 0
  %v160 = vsel %vm142, 1, 0
  %v161 = vsel %vm143, 1, 0
  %v162 = vsel %vm144, 1, 0
  %v163 = vsel %vm145, 1, 0
  %v164 = vsel %vm146, 1, 0
  %v165 = vsel %vm147, 1, 0
  %v166 = vsel %vm148, 1, 0
  %v167 = vsel %vm149, 1, 0
  %v168 = vsel %vm150, 1, 0
  %v169 = vsel %vm151, 1, 0
  %v170 = vsel %vm152, 1, 0
  %v171 = vsel %vm153, 1, 0
  %v172 = vsel %vm154, 1, 0
  %v173 = vcvt.s32.f32 %v155
  %v174 = vcvt.s32.f32 %v156
  %v175 = vcvt.s32.f32 %v157
  %v176 = vcvt.s32.f32 %v158
  %v177 = vcvt.s32.f32 %v159
  %v178 = vcvt.s32.f32 %v160
  %v179 = vcvt.s32.f32 %v161
  %v180 = vcvt.s32.f32 %v162
  %v181 = vcvt.s32.f32 %v163
  %v182 = vcvt.s32.f32 %v164
  %v183 = vcvt.s32.f32 %v165
  %v184 = vcvt.s32.f32 %v166
  %v185 = vcvt.s32.f32 %v167
  %v186 = vcvt.s32.f32 %v168
  %v187 = vcvt.s32.f32 %v169
  %v188 = vcvt.s32.f32 %v170
  %v189 = vcvt.s32.f32 %v171
  %v190 = vcvt.s32.f32 %v172
  %v191 = vadd.f32 %v119, %v120
  %v192 = vadd.f32 %v191, %v121
  %v193 = vadd.f32 %v192, %v122
  %v194 = vadd.f32 %v193, %v123
  %v195 = vadd.f32 %v194, %v124
  %v196 = vadd.f32 %v195, %v125
  %v197 = vadd.f32 %v196, %v126
  %v198 = vadd.f32 %v197, %v127
  %v199 = vadd.f32 %v198, %v128
  %v200 = vadd.f32 %v199, %v129
  %v201 = vadd.f32 %v200, %v130
  %v202 = vadd.f32 %v201, %v131
  %v203 = vadd.f32 %v202, %v132
  %v204 = vadd.f32 %v203, %v133
  %v205 = vadd.f32 %v204, %v134
  %v206 = vadd.f32 %v205, %v135
  %v207 = vadd.f32 %v206, %v136
  %208 = vadd.xlane.f32.xlu0 %v207
  %v209 = vpop.xlane.xlu0 %208
  %v210 = vrot.slane %v209, 4
  %v211 = vadd.f32 %v209, %v210
  %v212 = vrot.slane %v211, 2
  %v213 = vadd.f32 %v211, %v212
  %v214 = vrot.slane %v213, 1
  %v215 = vadd.f32 %v213, %v214
  %s216 = vtos %v215
  %s217 = smul.f32 %s216, 0.0078125
  %v218 = vsub.f32 %v11, %v29
  %v219 = vsub.f32 %v12, %v30
  %v220 = vsub.f32 %v13, %v31
  %v221 = vsub.f32 %v14, %v32
  %v222 = vsub.f32 %v15, %v33
  %v223 = vsub.f32 %v16, %v34
  %v224 = vsub.f32 %v17, %v35
  %v225 = vsub.f32 %v18, %v36
  %v226 = vsub.f32 %v19, %v37
  %v227 = vsub.f32 %v20, %v38
  %v228 = vsub.f32 %v21, %v39
  %v229 = vsub.f32 %v22, %v40
  %v230 = vsub.f32 %v23, %v41
  %v231 = vsub.f32 %v24, %v42
  %v232 = vsub.f32 %v25, %v43
  %v233 = vsub.f32 %v26, %v44
  %v234 = vsub.f32 %v27, %v45
  %v235 = vsub.f32 %v28, %v46
  %v236 = vmul.f32 %v218, %v173
  %v237 = vmul.f32 %v219, %v174
  %v238 = vmul.f32 %v220, %v175
  %v239 = vmul.f32 %v221, %v176
  %v240 = vmul.f32 %v222, %v177
  %v241 = vmul.f32 %v223, %v178
  %v242 = vmul.f32 %v224, %v179
  %v243 = vmul.f32 %v225, %v180
  %v244 = vmul.f32 %v226, %v181
  %v245 = vmul.f32 %v227, %v182
  %v246 = vmul.f32 %v228, %v183
  %v247 = vmul.f32 %v229, %v184
  %v248 = vmul.f32 %v230, %v185
  %v249 = vmul.f32 %v231, %v186
  %v250 = vmul.f32 %v232, %v187
  %v251 = vmul.f32 %v233, %v188
  %v252 = vmul.f32 %v234, %v189
  %v253 = vmul.f32 %v235, %v190
  %v254 = vand.u32 2147483647, %v236
  %v255 = vand.u32 2147483647, %v237
  %v256 = vand.u32 2147483647, %v238
  %v257 = vand.u32 2147483647, %v239
  %v258 = vand.u32 2147483647, %v240
  %v259 = vand.u32 2147483647, %v241
  %v260 = vand.u32 2147483647, %v242
  %v261 = vand.u32 2147483647, %v243
  %v262 = vand.u32 2147483647, %v244
  %v263 = vand.u32 2147483647, %v245
  %v264 = vand.u32 2147483647, %v246
  %v265 = vand.u32 2147483647, %v247
  %v266 = vand.u32 2147483647, %v248
  %v267 = vand.u32 2147483647, %v249
  %v268 = vand.u32 2147483647, %v250
  %v269 = vand.u32 2147483647, %v251
  %v270 = vand.u32 2147483647, %v252
  %v271 = vand.u32 2147483647, %v253
  %vm272 = vcmp.lt.f32.partialorder %v254, 0.11111111
  %vm273 = vcmp.lt.f32.partialorder %v255, 0.11111111
  %vm274 = vcmp.lt.f32.partialorder %v256, 0.11111111
  %vm275 = vcmp.lt.f32.partialorder %v257, 0.11111111
  %vm276 = vcmp.lt.f32.partialorder %v258, 0.11111111
  %vm277 = vcmp.lt.f32.partialorder %v259, 0.11111111
  %vm278 = vcmp.lt.f32.partialorder %v260, 0.11111111
  %vm279 = vcmp.lt.f32.partialorder %v261, 0.11111111
  %vm280 = vcmp.lt.f32.partialorder %v262, 0.11111111
  %vm281 = vcmp.lt.f32.partialorder %v263, 0.11111111
  %vm282 = vcmp.lt.f32.partialorder %v264, 0.11111111
  %vm283 = vcmp.lt.f32.partialorder %v265, 0.11111111
  %vm284 = vcmp.lt.f32.partialorder %v266, 0.11111111
  %vm285 = vcmp.lt.f32.partialorder %v267, 0.11111111
  %vm286 = vcmp.lt.f32.partialorder %v268, 0.11111111
  %vm287 = vcmp.lt.f32.partialorder %v269, 0.11111111
  %vm288 = vcmp.lt.f32.partialorder %v270, 0.11111111
  %vm289 = vcmp.lt.f32.partialorder %v271, 0.11111111
  %v290 = vsel %vm272, 1, 0
  %v291 = vsel %vm273, 1, 0
  %v292 = vsel %vm274, 1, 0
  %v293 = vsel %vm275, 1, 0
  %v294 = vsel %vm276, 1, 0
  %v295 = vsel %vm277, 1, 0
  %v296 = vsel %vm278, 1, 0
  %v297 = vsel %vm279, 1, 0
  %v298 = vsel %vm280, 1, 0
  %v299 = vsel %vm281, 1, 0
  %v300 = vsel %vm282, 1, 0
  %v301 = vsel %vm283, 1, 0
  %v302 = vsel %vm284, 1, 0
  %v303 = vsel %vm285, 1, 0
  %v304 = vsel %vm286, 1, 0
  %v305 = vsel %vm287, 1, 0
  %v306 = vsel %vm288, 1, 0
  %v307 = vsel %vm289, 1, 0
  %v308 = vcvt.s32.f32 %v290
  %v309 = vcvt.s32.f32 %v291
  %v310 = vcvt.s32.f32 %v292
  %v311 = vcvt.s32.f32 %v293
  %v312 = vcvt.s32.f32 %v294
  %v313 = vcvt.s32.f32 %v295
  %v314 = vcvt.s32.f32 %v296
  %v315 = vcvt.s32.f32 %v297
  %v316 = vcvt.s32.f32 %v298
  %v317 = vcvt.s32.f32 %v299
  %v318 = vcvt.s32.f32 %v300
  %v319 = vcvt.s32.f32 %v301
  %v320 = vcvt.s32.f32 %v302
  %v321 = vcvt.s32.f32 %v303
  %v322 = vcvt.s32.f32 %v304
  %v323 = vcvt.s32.f32 %v305
  %v324 = vcvt.s32.f32 %v306
  %v325 = vcvt.s32.f32 %v307
  %v326 = vmul.f32 %v308, 4.5
  %v327 = vmul.f32 %v309, 4.5
  %v328 = vmul.f32 %v310, 4.5
  %v329 = vmul.f32 %v311, 4.5
  %v330 = vmul.f32 %v312, 4.5
  %v331 = vmul.f32 %v313, 4.5
  %v332 = vmul.f32 %v314, 4.5
  %v333 = vmul.f32 %v315, 4.5
  %v334 = vmul.f32 %v316, 4.5
  %v335 = vmul.f32 %v317, 4.5
  %v336 = vmul.f32 %v318, 4.5
  %v337 = vmul.f32 %v319, 4.5
  %v338 = vmul.f32 %v320, 4.5
  %v339 = vmul.f32 %v321, 4.5
  %v340 = vmul.f32 %v322, 4.5
  %v341 = vmul.f32 %v323, 4.5
  %v342 = vmul.f32 %v324, 4.5
  %v343 = vmul.f32 %v325, 4.5
  %v344 = vmul.f32 %v326, %v236
  %v345 = vmul.f32 %v327, %v237
  %v346 = vmul.f32 %v328, %v238
  %v347 = vmul.f32 %v329, %v239
  %v348 = vmul.f32 %v330, %v240
  %v349 = vmul.f32 %v331, %v241
  %v350 = vmul.f32 %v332, %v242
  %v351 = vmul.f32 %v333, %v243
  %v352 = vmul.f32 %v334, %v244
  %v353 = vmul.f32 %v335, %v245
  %v354 = vmul.f32 %v336, %v246
  %v355 = vmul.f32 %v337, %v247
  %v356 = vmul.f32 %v338, %v248
  %v357 = vmul.f32 %v339, %v249
  %v358 = vmul.f32 %v340, %v250
  %v359 = vmul.f32 %v341, %v251
  %v360 = vmul.f32 %v342, %v252
  %v361 = vmul.f32 %v343, %v253
  %v362 = vmul.f32 %v344, %v236
  %v363 = vmul.f32 %v345, %v237
  %v364 = vmul.f32 %v346, %v238
  %v365 = vmul.f32 %v347, %v239
  %v366 = vmul.f32 %v348, %v240
  %v367 = vmul.f32 %v349, %v241
  %v368 = vmul.f32 %v350, %v242
  %v369 = vmul.f32 %v351, %v243
  %v370 = vmul.f32 %v352, %v244
  %v371 = vmul.f32 %v353, %v245
  %v372 = vmul.f32 %v354, %v246
  %v373 = vmul.f32 %v355, %v247
  %v374 = vmul.f32 %v356, %v248
  %v375 = vmul.f32 %v357, %v249
  %v376 = vmul.f32 %v358, %v250
  %v377 = vmul.f32 %v359, %v251
  %v378 = vmul.f32 %v360, %v252
  %v379 = vmul.f32 %v361, %v253
  %v380 = vsub.f32 1.0, %v308
  %v381 = vsub.f32 1.0, %v309
  %v382 = vsub.f32 1.0, %v310
  %v383 = vsub.f32 1.0, %v311
  %v384 = vsub.f32 1.0, %v312
  %v385 = vsub.f32 1.0, %v313
  %v386 = vsub.f32 1.0, %v314
  %v387 = vsub.f32 1.0, %v315
  %v388 = vsub.f32 1.0, %v316
  %v389 = vsub.f32 1.0, %v317
  %v390 = vsub.f32 1.0, %v318
  %v391 = vsub.f32 1.0, %v319
  %v392 = vsub.f32 1.0, %v320
  %v393 = vsub.f32 1.0, %v321
  %v394 = vsub.f32 1.0, %v322
  %v395 = vsub.f32 1.0, %v323
  %v396 = vsub.f32 1.0, %v324
  %v397 = vsub.f32 1.0, %v325
  %v398 = vsub.f32 %v254, 0.055555556
  %v399 = vsub.f32 %v255, 0.055555556
  %v400 = vsub.f32 %v256, 0.055555556
  %v401 = vsub.f32 %v257, 0.055555556
  %v402 = vsub.f32 %v258, 0.055555556
  %v403 = vsub.f32 %v259, 0.055555556
  %v404 = vsub.f32 %v260, 0.055555556
  %v405 = vsub.f32 %v261, 0.055555556
  %v406 = vsub.f32 %v262, 0.055555556
  %v407 = vsub.f32 %v263, 0.055555556
  %v408 = vsub.f32 %v264, 0.055555556
  %v409 = vsub.f32 %v265, 0.055555556
  %v410 = vsub.f32 %v266, 0.055555556
  %v411 = vsub.f32 %v267, 0.055555556
  %v412 = vsub.f32 %v268, 0.055555556
  %v413 = vsub.f32 %v269, 0.055555556
  %v414 = vsub.f32 %v270, 0.055555556
  %v415 = vsub.f32 %v271, 0.055555556
  %v416 = vmul.f32 %v380, %v398
  %v417 = vmul.f32 %v381, %v399
  %v418 = vmul.f32 %v382, %v400
  %v419 = vmul.f32 %v383, %v401
  %v420 = vmul.f32 %v384, %v402
  %v421 = vmul.f32 %v385, %v403
  %v422 = vmul.f32 %v386, %v404
  %v423 = vmul.f32 %v387, %v405
  %v424 = vmul.f32 %v388, %v406
  %v425 = vmul.f32 %v389, %v407
  %v426 = vmul.f32 %v390, %v408
  %v427 = vmul.f32 %v391, %v409
  %v428 = vmul.f32 %v392, %v410
  %v429 = vmul.f32 %v393, %v411
  %v430 = vmul.f32 %v394, %v412
  %v431 = vmul.f32 %v395, %v413
  %v432 = vmul.f32 %v396, %v414
  %v433 = vmul.f32 %v397, %v415
  %v434 = vadd.f32 %v362, %v416
  %v435 = vadd.f32 %v363, %v417
  %v436 = vadd.f32 %v364, %v418
  %v437 = vadd.f32 %v365, %v419
  %v438 = vadd.f32 %v366, %v420
  %v439 = vadd.f32 %v367, %v421
  %v440 = vadd.f32 %v368, %v422
  %v441 = vadd.f32 %v369, %v423
  %v442 = vadd.f32 %v370, %v424
  %v443 = vadd.f32 %v371, %v425
  %v444 = vadd.f32 %v372, %v426
  %v445 = vadd.f32 %v373, %v427
  %v446 = vadd.f32 %v374, %v428
  %v447 = vadd.f32 %v375, %v429
  %v448 = vadd.f32 %v376, %v430
  %v449 = vadd.f32 %v377, %v431
  %v450 = vadd.f32 %v378, %v432
  %v451 = vadd.f32 %v379, %v433
  %v452 = vadd.f32 %v434, %v435
  %v453 = vadd.f32 %v452, %v436
  %v454 = vadd.f32 %v453, %v437
  %v455 = vadd.f32 %v454, %v438
  %v456 = vadd.f32 %v455, %v439
  %v457 = vadd.f32 %v456, %v440
  %v458 = vadd.f32 %v457, %v441
  %v459 = vadd.f32 %v458, %v442
  %v460 = vadd.f32 %v459, %v443
  %v461 = vadd.f32 %v460, %v444
  %v462 = vadd.f32 %v461, %v445
  %v463 = vadd.f32 %v462, %v446
  %v464 = vadd.f32 %v463, %v447
  %v465 = vadd.f32 %v464, %v448
  %v466 = vadd.f32 %v465, %v449
  %v467 = vadd.f32 %v466, %v450
  %v468 = vadd.f32 %v467, %v451
  %469 = vadd.xlane.f32.xlu0 %v468
  %v470 = vpop.xlane.xlu0 %469
  %v471 = vrot.slane %v470, 4
  %v472 = vadd.f32 %v470, %v471
  %v473 = vrot.slane %v472, 2
  %v474 = vadd.f32 %v472, %v473
  %v475 = vrot.slane %v474, 1
  %v476 = vadd.f32 %v474, %v475
  %s477 = vtos %v476
  %v478 = vlaneseq
  %v479 = vand.u32 %v478, 127
  %480 = vmax.xlane.f32.xlu0 %v47
  %v481 = vpop.xlane.xlu0 %480
  %482 = vmax.xlane.f32.xlu0 %v48
  %v483 = vpop.xlane.xlu0 %482
  %484 = vmax.xlane.f32.xlu0 %v49
  %v485 = vpop.xlane.xlu0 %484
  %486 = vmax.xlane.f32.xlu0 %v50
  %v487 = vpop.xlane.xlu0 %486
  %488 = vmax.xlane.f32.xlu0 %v51
  %v489 = vpop.xlane.xlu0 %488
  %490 = vmax.xlane.f32.xlu0 %v52
  %v491 = vpop.xlane.xlu0 %490
  %492 = vmax.xlane.f32.xlu0 %v53
  %v493 = vpop.xlane.xlu0 %492
  %494 = vmax.xlane.f32.xlu0 %v54
  %v495 = vpop.xlane.xlu0 %494
  %496 = vmax.xlane.f32.xlu0 %v55
  %v497 = vpop.xlane.xlu0 %496
  %498 = vmax.xlane.f32.xlu0 %v56
  %v499 = vpop.xlane.xlu0 %498
  %500 = vmax.xlane.f32.xlu0 %v57
  %v501 = vpop.xlane.xlu0 %500
  %502 = vmax.xlane.f32.xlu0 %v58
  %v503 = vpop.xlane.xlu0 %502
  %504 = vmax.xlane.f32.xlu0 %v59
  %v505 = vpop.xlane.xlu0 %504
  %506 = vmax.xlane.f32.xlu0 %v60
  %v507 = vpop.xlane.xlu0 %506
  %508 = vmax.xlane.f32.xlu0 %v61
  %v509 = vpop.xlane.xlu0 %508
  %510 = vmax.xlane.f32.xlu0 %v62
  %v511 = vpop.xlane.xlu0 %510
  %512 = vmax.xlane.f32.xlu0 %v63
  %v513 = vpop.xlane.xlu0 %512
  %514 = vmax.xlane.f32.xlu0 %v64
  %v515 = vpop.xlane.xlu0 %514
  %v516 = vsub.f32 %v47, %v481
  %v517 = vsub.f32 %v48, %v483
  %v518 = vsub.f32 %v49, %v485
  %v519 = vsub.f32 %v50, %v487
  %v520 = vsub.f32 %v51, %v489
  %v521 = vsub.f32 %v52, %v491
  %v522 = vsub.f32 %v53, %v493
  %v523 = vsub.f32 %v54, %v495
  %v524 = vsub.f32 %v55, %v497
  %v525 = vsub.f32 %v56, %v499
  %v526 = vsub.f32 %v57, %v501
  %v527 = vsub.f32 %v58, %v503
  %v528 = vsub.f32 %v59, %v505
  %v529 = vsub.f32 %v60, %v507
  %v530 = vsub.f32 %v61, %v509
  %v531 = vsub.f32 %v62, %v511
  %v532 = vsub.f32 %v63, %v513
  %v533 = vsub.f32 %v64, %v515
  %v534 = vmul.f32 %v516, 1.442695
  %v535 = vpow.pop %v534
  %v536 = vmul.f32 %v517, 1.442695
  %v537 = vpow.pop %v536
  %v538 = vmul.f32 %v518, 1.442695
  %v539 = vpow.pop %v538
  %v540 = vmul.f32 %v519, 1.442695
  %v541 = vpow.pop %v540
  %v542 = vmul.f32 %v520, 1.442695
  %v543 = vpow.pop %v542
  %v544 = vmul.f32 %v521, 1.442695
  %v545 = vpow.pop %v544
  %v546 = vmul.f32 %v522, 1.442695
  %v547 = vpow.pop %v546
  %v548 = vmul.f32 %v523, 1.442695
  %v549 = vpow.pop %v548
  %v550 = vmul.f32 %v524, 1.442695
  %v551 = vpow.pop %v550
  %v552 = vmul.f32 %v525, 1.442695
  %v553 = vpow.pop %v552
  %v554 = vmul.f32 %v526, 1.442695
  %v555 = vpow.pop %v554
  %v556 = vmul.f32 %v527, 1.442695
  %v557 = vpow.pop %v556
  %v558 = vmul.f32 %v528, 1.442695
  %v559 = vpow.pop %v558
  %v560 = vmul.f32 %v529, 1.442695
  %v561 = vpow.pop %v560
  %v562 = vmul.f32 %v530, 1.442695
  %v563 = vpow.pop %v562
  %v564 = vmul.f32 %v531, 1.442695
  %v565 = vpow.pop %v564
  %v566 = vmul.f32 %v532, 1.442695
  %v567 = vpow.pop %v566
  %v568 = vmul.f32 %v533, 1.442695
  %v569 = vpow.pop %v568
  %570 = vadd.xlane.f32.xlu0 %v535
  %v571 = vpop.xlane.xlu0 %570
  %572 = vadd.xlane.f32.xlu0 %v537
  %v573 = vpop.xlane.xlu0 %572
  %574 = vadd.xlane.f32.xlu0 %v539
  %v575 = vpop.xlane.xlu0 %574
  %576 = vadd.xlane.f32.xlu0 %v541
  %v577 = vpop.xlane.xlu0 %576
  %578 = vadd.xlane.f32.xlu0 %v543
  %v579 = vpop.xlane.xlu0 %578
  %580 = vadd.xlane.f32.xlu0 %v545
  %v581 = vpop.xlane.xlu0 %580
  %582 = vadd.xlane.f32.xlu0 %v547
  %v583 = vpop.xlane.xlu0 %582
  %584 = vadd.xlane.f32.xlu0 %v549
  %v585 = vpop.xlane.xlu0 %584
  %586 = vadd.xlane.f32.xlu0 %v551
  %v587 = vpop.xlane.xlu0 %586
  %588 = vadd.xlane.f32.xlu0 %v553
  %v589 = vpop.xlane.xlu0 %588
  %590 = vadd.xlane.f32.xlu0 %v555
  %v591 = vpop.xlane.xlu0 %590
  %592 = vadd.xlane.f32.xlu0 %v557
  %v593 = vpop.xlane.xlu0 %592
  %594 = vadd.xlane.f32.xlu0 %v559
  %v595 = vpop.xlane.xlu0 %594
  %596 = vadd.xlane.f32.xlu0 %v561
  %v597 = vpop.xlane.xlu0 %596
  %598 = vadd.xlane.f32.xlu0 %v563
  %v599 = vpop.xlane.xlu0 %598
  %600 = vadd.xlane.f32.xlu0 %v565
  %v601 = vpop.xlane.xlu0 %600
  %602 = vadd.xlane.f32.xlu0 %v567
  %v603 = vpop.xlane.xlu0 %602
  %604 = vadd.xlane.f32.xlu0 %v569
  %v605 = vpop.xlane.xlu0 %604
  %v606 = vlog2.pop %v571
  %v607 = vmul.f32 %v606, 0.6931472
  %v608 = vlog2.pop %v573
  %v609 = vmul.f32 %v608, 0.6931472
  %v610 = vlog2.pop %v575
  %v611 = vmul.f32 %v610, 0.6931472
  %v612 = vlog2.pop %v577
  %v613 = vmul.f32 %v612, 0.6931472
  %v614 = vlog2.pop %v579
  %v615 = vmul.f32 %v614, 0.6931472
  %v616 = vlog2.pop %v581
  %v617 = vmul.f32 %v616, 0.6931472
  %v618 = vlog2.pop %v583
  %v619 = vmul.f32 %v618, 0.6931472
  %v620 = vlog2.pop %v585
  %v621 = vmul.f32 %v620, 0.6931472
  %v622 = vlog2.pop %v587
  %v623 = vmul.f32 %v622, 0.6931472
  %v624 = vlog2.pop %v589
  %v625 = vmul.f32 %v624, 0.6931472
  %v626 = vlog2.pop %v591
  %v627 = vmul.f32 %v626, 0.6931472
  %v628 = vlog2.pop %v593
  %v629 = vmul.f32 %v628, 0.6931472
  %v630 = vlog2.pop %v595
  %v631 = vmul.f32 %v630, 0.6931472
  %v632 = vlog2.pop %v597
  %v633 = vmul.f32 %v632, 0.6931472
  %v634 = vlog2.pop %v599
  %v635 = vmul.f32 %v634, 0.6931472
  %v636 = vlog2.pop %v601
  %v637 = vmul.f32 %v636, 0.6931472
  %v638 = vlog2.pop %v603
  %v639 = vmul.f32 %v638, 0.6931472
  %v640 = vlog2.pop %v605
  %v641 = vmul.f32 %v640, 0.6931472
  %v642 = vsub.f32 %v516, %v607
  %v643 = vsub.f32 %v517, %v609
  %v644 = vsub.f32 %v518, %v611
  %v645 = vsub.f32 %v519, %v613
  %v646 = vsub.f32 %v520, %v615
  %v647 = vsub.f32 %v521, %v617
  %v648 = vsub.f32 %v522, %v619
  %v649 = vsub.f32 %v523, %v621
  %v650 = vsub.f32 %v524, %v623
  %v651 = vsub.f32 %v525, %v625
  %v652 = vsub.f32 %v526, %v627
  %v653 = vsub.f32 %v527, %v629
  %v654 = vsub.f32 %v528, %v631
  %v655 = vsub.f32 %v529, %v633
  %v656 = vsub.f32 %v530, %v635
  %v657 = vsub.f32 %v531, %v637
  %v658 = vsub.f32 %v532, %v639
  %v659 = vsub.f32 %v533, %v641
  %v660 = vcvt.f32.s32.to.zero.pseudo %v65
  %v661 = vcvt.f32.s32.to.zero.pseudo %v66
  %v662 = vcvt.f32.s32.to.zero.pseudo %v67
  %v663 = vcvt.f32.s32.to.zero.pseudo %v68
  %v664 = vcvt.f32.s32.to.zero.pseudo %v69
  %v665 = vcvt.f32.s32.to.zero.pseudo %v70
  %v666 = vcvt.f32.s32.to.zero.pseudo %v71
  %v667 = vcvt.f32.s32.to.zero.pseudo %v72
  %v668 = vcvt.f32.s32.to.zero.pseudo %v73
  %v669 = vcvt.f32.s32.to.zero.pseudo %v74
  %v670 = vcvt.f32.s32.to.zero.pseudo %v75
  %v671 = vcvt.f32.s32.to.zero.pseudo %v76
  %v672 = vcvt.f32.s32.to.zero.pseudo %v77
  %v673 = vcvt.f32.s32.to.zero.pseudo %v78
  %v674 = vcvt.f32.s32.to.zero.pseudo %v79
  %v675 = vcvt.f32.s32.to.zero.pseudo %v80
  %v676 = vcvt.f32.s32.to.zero.pseudo %v81
  %v677 = vcvt.f32.s32.to.zero.pseudo %v82
  %vm678 = vcmp.eq.s32.totalorder %v479, %v660
  %vm679 = vcmp.eq.s32.totalorder %v479, %v661
  %vm680 = vcmp.eq.s32.totalorder %v479, %v662
  %vm681 = vcmp.eq.s32.totalorder %v479, %v663
  %vm682 = vcmp.eq.s32.totalorder %v479, %v664
  %vm683 = vcmp.eq.s32.totalorder %v479, %v665
  %vm684 = vcmp.eq.s32.totalorder %v479, %v666
  %vm685 = vcmp.eq.s32.totalorder %v479, %v667
  %vm686 = vcmp.eq.s32.totalorder %v479, %v668
  %vm687 = vcmp.eq.s32.totalorder %v479, %v669
  %vm688 = vcmp.eq.s32.totalorder %v479, %v670
  %vm689 = vcmp.eq.s32.totalorder %v479, %v671
  %vm690 = vcmp.eq.s32.totalorder %v479, %v672
  %vm691 = vcmp.eq.s32.totalorder %v479, %v673
  %vm692 = vcmp.eq.s32.totalorder %v479, %v674
  %vm693 = vcmp.eq.s32.totalorder %v479, %v675
  %vm694 = vcmp.eq.s32.totalorder %v479, %v676
  %vm695 = vcmp.eq.s32.totalorder %v479, %v677
  %v696 = vsel %vm678, 1, 0
  %v697 = vsel %vm679, 1, 0
  %v698 = vsel %vm680, 1, 0
  %v699 = vsel %vm681, 1, 0
  %v700 = vsel %vm682, 1, 0
  %v701 = vsel %vm683, 1, 0
  %v702 = vsel %vm684, 1, 0
  %v703 = vsel %vm685, 1, 0
  %v704 = vsel %vm686, 1, 0
  %v705 = vsel %vm687, 1, 0
  %v706 = vsel %vm688, 1, 0
  %v707 = vsel %vm689, 1, 0
  %v708 = vsel %vm690, 1, 0
  %v709 = vsel %vm691, 1, 0
  %v710 = vsel %vm692, 1, 0
  %v711 = vsel %vm693, 1, 0
  %v712 = vsel %vm694, 1, 0
  %v713 = vsel %vm695, 1, 0
  %v714 = vcvt.s32.f32 %v696
  %v715 = vcvt.s32.f32 %v697
  %v716 = vcvt.s32.f32 %v698
  %v717 = vcvt.s32.f32 %v699
  %v718 = vcvt.s32.f32 %v700
  %v719 = vcvt.s32.f32 %v701
  %v720 = vcvt.s32.f32 %v702
  %v721 = vcvt.s32.f32 %v703
  %v722 = vcvt.s32.f32 %v704
  %v723 = vcvt.s32.f32 %v705
  %v724 = vcvt.s32.f32 %v706
  %v725 = vcvt.s32.f32 %v707
  %v726 = vcvt.s32.f32 %v708
  %v727 = vcvt.s32.f32 %v709
  %v728 = vcvt.s32.f32 %v710
  %v729 = vcvt.s32.f32 %v711
  %v730 = vcvt.s32.f32 %v712
  %v731 = vcvt.s32.f32 %v713
  %v732 = vmul.f32 %v714, %v119
  %v733 = vmul.f32 %v715, %v120
  %v734 = vmul.f32 %v716, %v121
  %v735 = vmul.f32 %v717, %v122
  %v736 = vmul.f32 %v718, %v123
  %v737 = vmul.f32 %v719, %v124
  %v738 = vmul.f32 %v720, %v125
  %v739 = vmul.f32 %v721, %v126
  %v740 = vmul.f32 %v722, %v127
  %v741 = vmul.f32 %v723, %v128
  %v742 = vmul.f32 %v724, %v129
  %v743 = vmul.f32 %v725, %v130
  %v744 = vmul.f32 %v726, %v131
  %v745 = vmul.f32 %v727, %v132
  %v746 = vmul.f32 %v728, %v133
  %v747 = vmul.f32 %v729, %v134
  %v748 = vmul.f32 %v730, %v135
  %v749 = vmul.f32 %v731, %v136
  %v750 = vmul.f32 %v732, %v642
  %v751 = vmul.f32 %v733, %v643
  %v752 = vmul.f32 %v734, %v644
  %v753 = vmul.f32 %v735, %v645
  %v754 = vmul.f32 %v736, %v646
  %v755 = vmul.f32 %v737, %v647
  %v756 = vmul.f32 %v738, %v648
  %v757 = vmul.f32 %v739, %v649
  %v758 = vmul.f32 %v740, %v650
  %v759 = vmul.f32 %v741, %v651
  %v760 = vmul.f32 %v742, %v652
  %v761 = vmul.f32 %v743, %v653
  %v762 = vmul.f32 %v744, %v654
  %v763 = vmul.f32 %v745, %v655
  %v764 = vmul.f32 %v746, %v656
  %v765 = vmul.f32 %v747, %v657
  %v766 = vmul.f32 %v748, %v658
  %v767 = vmul.f32 %v749, %v659
  %v768 = vadd.f32 %v750, %v751
  %v769 = vadd.f32 %v768, %v752
  %v770 = vadd.f32 %v769, %v753
  %v771 = vadd.f32 %v770, %v754
  %v772 = vadd.f32 %v771, %v755
  %v773 = vadd.f32 %v772, %v756
  %v774 = vadd.f32 %v773, %v757
  %v775 = vadd.f32 %v774, %v758
  %v776 = vadd.f32 %v775, %v759
  %v777 = vadd.f32 %v776, %v760
  %v778 = vadd.f32 %v777, %v761
  %v779 = vadd.f32 %v778, %v762
  %v780 = vadd.f32 %v779, %v763
  %v781 = vadd.f32 %v780, %v764
  %v782 = vadd.f32 %v781, %v765
  %v783 = vadd.f32 %v782, %v766
  %v784 = vadd.f32 %v783, %v767
  %785 = vadd.xlane.f32.xlu0 %v784
  %v786 = vpop.xlane.xlu0 %785
  %v787 = vrot.slane %v786, 4
  %v788 = vadd.f32 %v786, %v787
  %v789 = vrot.slane %v788, 2
  %v790 = vadd.f32 %v788, %v789
  %v791 = vrot.slane %v790, 1
  %v792 = vadd.f32 %v790, %v791
  %s793 = vtos %v792
  %s794 = ssub.f32 0.0, %s793
  %v795 = vstv %s217
  %v796 = vrcp.pop %v795
  %v797 = vmul.f32 %v795, %v796
  %v798 = vsub.f32 1.0, %v797
  %v799 = vmul.f32 %v796, %v798
  %v800 = vadd.f32 %v796, %v799
  %vm801 = vweird.f32 %v795
  %vm802 = vweird.f32 %v796
  %vm803 = vmor %vm801, %vm802
  %v804 = vsel %vm803, %v796, %v800
  %v805 = vand.u32 2147483647, %v795
  %vm806 = vcmp.eq.f32.partialorder %v805, 8.507059e+37
  %v807 = vand.u32 %v795, 2147483648
  %v808 = vor.u32 1.1754944e-38, %v807
  %v809 = vsel %vm806, %v808, %v804
  %s810 = vtos %v809
  %s811 = smul.f32 %s477, %s810
  %s812 = smul.f32 %s794, %s810
  %v813 = vld [vmem:[%s1] sm:$0xff]
  %v814 = vld [vmem:[%s1 + $0x20] sm:$0xff]
  %v815 = vld [vmem:[%s1 + $0x40] sm:$0xff]
  %v816 = vld [vmem:[%s1 + $0x60] sm:$0xff]
  %v817 = vld [vmem:[%s1 + $0x80] sm:$0xff]
  %v818 = vld [vmem:[%s1 + $0xa0] sm:$0xff]
  %v819 = vld [vmem:[%s1 + $0xc0] sm:$0xff]
  %v820 = vld [vmem:[%s1 + $0xe0] sm:$0xff]
  %v821 = vld [vmem:[%s1 + $0x100] sm:$0xff]
  %v822 = vld [vmem:[%s1 + $0x120] sm:$0xff]
  %v823 = vld [vmem:[%s1 + $0x140] sm:$0xff]
  %v824 = vld [vmem:[%s1 + $0x160] sm:$0xff]
  %v825 = vld [vmem:[%s1 + $0x180] sm:$0xff]
  %v826 = vld [vmem:[%s1 + $0x1a0] sm:$0xff]
  %v827 = vld [vmem:[%s1 + $0x1c0] sm:$0xff]
  %v828 = vld [vmem:[%s1 + $0x1e0] sm:$0xff]
  %v829 = vld [vmem:[%s1 + $0x8] sm:$0xff]
  %v830 = vld [vmem:[%s1 + $0x28] sm:$0xff]
  %v831 = vld [vmem:[%s1 + $0x48] sm:$0xff]
  %v832 = vld [vmem:[%s1 + $0x68] sm:$0xff]
  %v833 = vld [vmem:[%s1 + $0x88] sm:$0xff]
  %v834 = vld [vmem:[%s1 + $0xa8] sm:$0xff]
  %v835 = vld [vmem:[%s1 + $0xc8] sm:$0xff]
  %v836 = vld [vmem:[%s1 + $0xe8] sm:$0xff]
  %v837 = vld [vmem:[%s1 + $0x108] sm:$0xff]
  %v838 = vld [vmem:[%s1 + $0x128] sm:$0xff]
  %v839 = vld [vmem:[%s1 + $0x148] sm:$0xff]
  %v840 = vld [vmem:[%s1 + $0x168] sm:$0xff]
  %v841 = vld [vmem:[%s1 + $0x188] sm:$0xff]
  %v842 = vld [vmem:[%s1 + $0x1a8] sm:$0xff]
  %v843 = vld [vmem:[%s1 + $0x1c8] sm:$0xff]
  %v844 = vld [vmem:[%s1 + $0x1e8] sm:$0xff]
  %v845 = vld [vmem:[%s1 + $0x10] sm:$0xff]
  %v846 = vld [vmem:[%s1 + $0x30] sm:$0xff]
  %v847 = vld [vmem:[%s1 + $0x50] sm:$0xff]
  %v848 = vld [vmem:[%s1 + $0x70] sm:$0xff]
  %v849 = vld [vmem:[%s1 + $0x90] sm:$0xff]
  %v850 = vld [vmem:[%s1 + $0xb0] sm:$0xff]
  %v851 = vld [vmem:[%s1 + $0xd0] sm:$0xff]
  %v852 = vld [vmem:[%s1 + $0xf0] sm:$0xff]
  %v853 = vld [vmem:[%s1 + $0x110] sm:$0xff]
  %v854 = vld [vmem:[%s1 + $0x130] sm:$0xff]
  %v855 = vld [vmem:[%s1 + $0x150] sm:$0xff]
  %v856 = vld [vmem:[%s1 + $0x170] sm:$0xff]
  %v857 = vld [vmem:[%s1 + $0x190] sm:$0xff]
  %v858 = vld [vmem:[%s1 + $0x1b0] sm:$0xff]
  %v859 = vld [vmem:[%s1 + $0x1d0] sm:$0xff]
  %v860 = vld [vmem:[%s1 + $0x1f0] sm:$0xff]
  %v861 = vld [vmem:[%s1 + $0x18] sm:$0xff]
  %v862 = vld [vmem:[%s1 + $0x38] sm:$0xff]
  %v863 = vld [vmem:[%s1 + $0x58] sm:$0xff]
  %v864 = vld [vmem:[%s1 + $0x78] sm:$0xff]
  %v865 = vld [vmem:[%s1 + $0x98] sm:$0xff]
  %v866 = vld [vmem:[%s1 + $0xb8] sm:$0xff]
  %v867 = vld [vmem:[%s1 + $0xd8] sm:$0xff]
  %v868 = vld [vmem:[%s1 + $0xf8] sm:$0xff]
  %v869 = vld [vmem:[%s1 + $0x118] sm:$0xff]
  %v870 = vld [vmem:[%s1 + $0x138] sm:$0xff]
  %v871 = vld [vmem:[%s1 + $0x158] sm:$0xff]
  %v872 = vld [vmem:[%s1 + $0x178] sm:$0xff]
  %v873 = vld [vmem:[%s1 + $0x198] sm:$0xff]
  %v874 = vld [vmem:[%s1 + $0x1b8] sm:$0xff]
  %v875 = vld [vmem:[%s1 + $0x1d8] sm:$0xff]
  %v876 = vld [vmem:[%s1 + $0x1f8] sm:$0xff]
  %v877 = vcvt.f32.s32.to.zero.pseudo %v861
  %v878 = vcvt.f32.s32.to.zero.pseudo %v862
  %v879 = vcvt.f32.s32.to.zero.pseudo %v863
  %v880 = vcvt.f32.s32.to.zero.pseudo %v864
  %v881 = vcvt.f32.s32.to.zero.pseudo %v865
  %v882 = vcvt.f32.s32.to.zero.pseudo %v866
  %v883 = vcvt.f32.s32.to.zero.pseudo %v867
  %v884 = vcvt.f32.s32.to.zero.pseudo %v868
  %v885 = vcvt.f32.s32.to.zero.pseudo %v869
  %v886 = vcvt.f32.s32.to.zero.pseudo %v870
  %v887 = vcvt.f32.s32.to.zero.pseudo %v871
  %v888 = vcvt.f32.s32.to.zero.pseudo %v872
  %v889 = vcvt.f32.s32.to.zero.pseudo %v873
  %v890 = vcvt.f32.s32.to.zero.pseudo %v874
  %v891 = vcvt.f32.s32.to.zero.pseudo %v875
  %v892 = vcvt.f32.s32.to.zero.pseudo %v876
  %v893 = vshra.s32 %v479, 2
  %vm894 = vcmp.eq.s32.totalorder %v893, %v877
  %vm895 = vcmp.eq.s32.totalorder %v893, %v878
  %vm896 = vcmp.eq.s32.totalorder %v893, %v879
  %vm897 = vcmp.eq.s32.totalorder %v893, %v880
  %vm898 = vcmp.eq.s32.totalorder %v893, %v881
  %vm899 = vcmp.eq.s32.totalorder %v893, %v882
  %vm900 = vcmp.eq.s32.totalorder %v893, %v883
  %vm901 = vcmp.eq.s32.totalorder %v893, %v884
  %vm902 = vcmp.eq.s32.totalorder %v893, %v885
  %vm903 = vcmp.eq.s32.totalorder %v893, %v886
  %vm904 = vcmp.eq.s32.totalorder %v893, %v887
  %vm905 = vcmp.eq.s32.totalorder %v893, %v888
  %vm906 = vcmp.eq.s32.totalorder %v893, %v889
  %vm907 = vcmp.eq.s32.totalorder %v893, %v890
  %vm908 = vcmp.eq.s32.totalorder %v893, %v891
  %vm909 = vcmp.eq.s32.totalorder %v893, %v892
  %vm910 = vcmp.gt.s32.totalorder %v877, 0
  %vm911 = vcmp.gt.s32.totalorder %v878, 0
  %vm912 = vcmp.gt.s32.totalorder %v879, 0
  %vm913 = vcmp.gt.s32.totalorder %v880, 0
  %vm914 = vcmp.gt.s32.totalorder %v881, 0
  %vm915 = vcmp.gt.s32.totalorder %v882, 0
  %vm916 = vcmp.gt.s32.totalorder %v883, 0
  %vm917 = vcmp.gt.s32.totalorder %v884, 0
  %vm918 = vcmp.gt.s32.totalorder %v885, 0
  %vm919 = vcmp.gt.s32.totalorder %v886, 0
  %vm920 = vcmp.gt.s32.totalorder %v887, 0
  %vm921 = vcmp.gt.s32.totalorder %v888, 0
  %vm922 = vcmp.gt.s32.totalorder %v889, 0
  %vm923 = vcmp.gt.s32.totalorder %v890, 0
  %vm924 = vcmp.gt.s32.totalorder %v891, 0
  %vm925 = vcmp.gt.s32.totalorder %v892, 0
  %vm926 = vmand %vm894, %vm910
  %vm927 = vmand %vm895, %vm911
  %vm928 = vmand %vm896, %vm912
  %vm929 = vmand %vm897, %vm913
  %vm930 = vmand %vm898, %vm914
  %vm931 = vmand %vm899, %vm915
  %vm932 = vmand %vm900, %vm916
  %vm933 = vmand %vm901, %vm917
  %vm934 = vmand %vm902, %vm918
  %vm935 = vmand %vm903, %vm919
  %vm936 = vmand %vm904, %vm920
  %vm937 = vmand %vm905, %vm921
  %vm938 = vmand %vm906, %vm922
  %vm939 = vmand %vm907, %vm923
  %vm940 = vmand %vm908, %vm924
  %vm941 = vmand %vm909, %vm925
  %v942 = vsel %vm926, 1, 0
  %v943 = vsel %vm927, 1, 0
  %v944 = vsel %vm928, 1, 0
  %v945 = vsel %vm929, 1, 0
  %v946 = vsel %vm930, 1, 0
  %v947 = vsel %vm931, 1, 0
  %v948 = vsel %vm932, 1, 0
  %v949 = vsel %vm933, 1, 0
  %v950 = vsel %vm934, 1, 0
  %v951 = vsel %vm935, 1, 0
  %v952 = vsel %vm936, 1, 0
  %v953 = vsel %vm937, 1, 0
  %v954 = vsel %vm938, 1, 0
  %v955 = vsel %vm939, 1, 0
  %v956 = vsel %vm940, 1, 0
  %v957 = vsel %vm941, 1, 0
  %v958 = vcvt.s32.f32 %v942
  %v959 = vcvt.s32.f32 %v943
  %v960 = vcvt.s32.f32 %v944
  %v961 = vcvt.s32.f32 %v945
  %v962 = vcvt.s32.f32 %v946
  %v963 = vcvt.s32.f32 %v947
  %v964 = vcvt.s32.f32 %v948
  %v965 = vcvt.s32.f32 %v949
  %v966 = vcvt.s32.f32 %v950
  %v967 = vcvt.s32.f32 %v951
  %v968 = vcvt.s32.f32 %v952
  %v969 = vcvt.s32.f32 %v953
  %v970 = vcvt.s32.f32 %v954
  %v971 = vcvt.s32.f32 %v955
  %v972 = vcvt.s32.f32 %v956
  %v973 = vcvt.s32.f32 %v957
  %v974 = vsub.f32 %v813, %v829
  %v975 = vsub.f32 %v814, %v830
  %v976 = vsub.f32 %v815, %v831
  %v977 = vsub.f32 %v816, %v832
  %v978 = vsub.f32 %v817, %v833
  %v979 = vsub.f32 %v818, %v834
  %v980 = vsub.f32 %v819, %v835
  %v981 = vsub.f32 %v820, %v836
  %v982 = vsub.f32 %v821, %v837
  %v983 = vsub.f32 %v822, %v838
  %v984 = vsub.f32 %v823, %v839
  %v985 = vsub.f32 %v824, %v840
  %v986 = vsub.f32 %v825, %v841
  %v987 = vsub.f32 %v826, %v842
  %v988 = vsub.f32 %v827, %v843
  %v989 = vsub.f32 %v828, %v844
  %v990 = vmul.f32 %v974, %v958
  %v991 = vmul.f32 %v975, %v959
  %v992 = vmul.f32 %v976, %v960
  %v993 = vmul.f32 %v977, %v961
  %v994 = vmul.f32 %v978, %v962
  %v995 = vmul.f32 %v979, %v963
  %v996 = vmul.f32 %v980, %v964
  %v997 = vmul.f32 %v981, %v965
  %v998 = vmul.f32 %v982, %v966
  %v999 = vmul.f32 %v983, %v967
  %v1000 = vmul.f32 %v984, %v968
  %v1001 = vmul.f32 %v985, %v969
  %v1002 = vmul.f32 %v986, %v970
  %v1003 = vmul.f32 %v987, %v971
  %v1004 = vmul.f32 %v988, %v972
  %v1005 = vmul.f32 %v989, %v973
  %v1006 = vand.u32 2147483647, %v990
  %v1007 = vand.u32 2147483647, %v991
  %v1008 = vand.u32 2147483647, %v992
  %v1009 = vand.u32 2147483647, %v993
  %v1010 = vand.u32 2147483647, %v994
  %v1011 = vand.u32 2147483647, %v995
  %v1012 = vand.u32 2147483647, %v996
  %v1013 = vand.u32 2147483647, %v997
  %v1014 = vand.u32 2147483647, %v998
  %v1015 = vand.u32 2147483647, %v999
  %v1016 = vand.u32 2147483647, %v1000
  %v1017 = vand.u32 2147483647, %v1001
  %v1018 = vand.u32 2147483647, %v1002
  %v1019 = vand.u32 2147483647, %v1003
  %v1020 = vand.u32 2147483647, %v1004
  %v1021 = vand.u32 2147483647, %v1005
  %vm1022 = vcmp.lt.f32.partialorder %v1006, 1.0
  %vm1023 = vcmp.lt.f32.partialorder %v1007, 1.0
  %vm1024 = vcmp.lt.f32.partialorder %v1008, 1.0
  %vm1025 = vcmp.lt.f32.partialorder %v1009, 1.0
  %vm1026 = vcmp.lt.f32.partialorder %v1010, 1.0
  %vm1027 = vcmp.lt.f32.partialorder %v1011, 1.0
  %vm1028 = vcmp.lt.f32.partialorder %v1012, 1.0
  %vm1029 = vcmp.lt.f32.partialorder %v1013, 1.0
  %vm1030 = vcmp.lt.f32.partialorder %v1014, 1.0
  %vm1031 = vcmp.lt.f32.partialorder %v1015, 1.0
  %vm1032 = vcmp.lt.f32.partialorder %v1016, 1.0
  %vm1033 = vcmp.lt.f32.partialorder %v1017, 1.0
  %vm1034 = vcmp.lt.f32.partialorder %v1018, 1.0
  %vm1035 = vcmp.lt.f32.partialorder %v1019, 1.0
  %vm1036 = vcmp.lt.f32.partialorder %v1020, 1.0
  %vm1037 = vcmp.lt.f32.partialorder %v1021, 1.0
  %v1038 = vsel %vm1022, 1, 0
  %v1039 = vsel %vm1023, 1, 0
  %v1040 = vsel %vm1024, 1, 0
  %v1041 = vsel %vm1025, 1, 0
  %v1042 = vsel %vm1026, 1, 0
  %v1043 = vsel %vm1027, 1, 0
  %v1044 = vsel %vm1028, 1, 0
  %v1045 = vsel %vm1029, 1, 0
  %v1046 = vsel %vm1030, 1, 0
  %v1047 = vsel %vm1031, 1, 0
  %v1048 = vsel %vm1032, 1, 0
  %v1049 = vsel %vm1033, 1, 0
  %v1050 = vsel %vm1034, 1, 0
  %v1051 = vsel %vm1035, 1, 0
  %v1052 = vsel %vm1036, 1, 0
  %v1053 = vsel %vm1037, 1, 0
  %v1054 = vcvt.s32.f32 %v1038
  %v1055 = vcvt.s32.f32 %v1039
  %v1056 = vcvt.s32.f32 %v1040
  %v1057 = vcvt.s32.f32 %v1041
  %v1058 = vcvt.s32.f32 %v1042
  %v1059 = vcvt.s32.f32 %v1043
  %v1060 = vcvt.s32.f32 %v1044
  %v1061 = vcvt.s32.f32 %v1045
  %v1062 = vcvt.s32.f32 %v1046
  %v1063 = vcvt.s32.f32 %v1047
  %v1064 = vcvt.s32.f32 %v1048
  %v1065 = vcvt.s32.f32 %v1049
  %v1066 = vcvt.s32.f32 %v1050
  %v1067 = vcvt.s32.f32 %v1051
  %v1068 = vcvt.s32.f32 %v1052
  %v1069 = vcvt.s32.f32 %v1053
  %v1070 = vmul.f32 %v1054, 0.5
  %v1071 = vmul.f32 %v1055, 0.5
  %v1072 = vmul.f32 %v1056, 0.5
  %v1073 = vmul.f32 %v1057, 0.5
  %v1074 = vmul.f32 %v1058, 0.5
  %v1075 = vmul.f32 %v1059, 0.5
  %v1076 = vmul.f32 %v1060, 0.5
  %v1077 = vmul.f32 %v1061, 0.5
  %v1078 = vmul.f32 %v1062, 0.5
  %v1079 = vmul.f32 %v1063, 0.5
  %v1080 = vmul.f32 %v1064, 0.5
  %v1081 = vmul.f32 %v1065, 0.5
  %v1082 = vmul.f32 %v1066, 0.5
  %v1083 = vmul.f32 %v1067, 0.5
  %v1084 = vmul.f32 %v1068, 0.5
  %v1085 = vmul.f32 %v1069, 0.5
  %v1086 = vmul.f32 %v1070, %v990
  %v1087 = vmul.f32 %v1071, %v991
  %v1088 = vmul.f32 %v1072, %v992
  %v1089 = vmul.f32 %v1073, %v993
  %v1090 = vmul.f32 %v1074, %v994
  %v1091 = vmul.f32 %v1075, %v995
  %v1092 = vmul.f32 %v1076, %v996
  %v1093 = vmul.f32 %v1077, %v997
  %v1094 = vmul.f32 %v1078, %v998
  %v1095 = vmul.f32 %v1079, %v999
  %v1096 = vmul.f32 %v1080, %v1000
  %v1097 = vmul.f32 %v1081, %v1001
  %v1098 = vmul.f32 %v1082, %v1002
  %v1099 = vmul.f32 %v1083, %v1003
  %v1100 = vmul.f32 %v1084, %v1004
  %v1101 = vmul.f32 %v1085, %v1005
  %v1102 = vmul.f32 %v1086, %v990
  %v1103 = vmul.f32 %v1087, %v991
  %v1104 = vmul.f32 %v1088, %v992
  %v1105 = vmul.f32 %v1089, %v993
  %v1106 = vmul.f32 %v1090, %v994
  %v1107 = vmul.f32 %v1091, %v995
  %v1108 = vmul.f32 %v1092, %v996
  %v1109 = vmul.f32 %v1093, %v997
  %v1110 = vmul.f32 %v1094, %v998
  %v1111 = vmul.f32 %v1095, %v999
  %v1112 = vmul.f32 %v1096, %v1000
  %v1113 = vmul.f32 %v1097, %v1001
  %v1114 = vmul.f32 %v1098, %v1002
  %v1115 = vmul.f32 %v1099, %v1003
  %v1116 = vmul.f32 %v1100, %v1004
  %v1117 = vmul.f32 %v1101, %v1005
  %v1118 = vsub.f32 1.0, %v1054
  %v1119 = vsub.f32 1.0, %v1055
  %v1120 = vsub.f32 1.0, %v1056
  %v1121 = vsub.f32 1.0, %v1057
  %v1122 = vsub.f32 1.0, %v1058
  %v1123 = vsub.f32 1.0, %v1059
  %v1124 = vsub.f32 1.0, %v1060
  %v1125 = vsub.f32 1.0, %v1061
  %v1126 = vsub.f32 1.0, %v1062
  %v1127 = vsub.f32 1.0, %v1063
  %v1128 = vsub.f32 1.0, %v1064
  %v1129 = vsub.f32 1.0, %v1065
  %v1130 = vsub.f32 1.0, %v1066
  %v1131 = vsub.f32 1.0, %v1067
  %v1132 = vsub.f32 1.0, %v1068
  %v1133 = vsub.f32 1.0, %v1069
  %v1134 = vsub.f32 %v1006, 0.5
  %v1135 = vsub.f32 %v1007, 0.5
  %v1136 = vsub.f32 %v1008, 0.5
  %v1137 = vsub.f32 %v1009, 0.5
  %v1138 = vsub.f32 %v1010, 0.5
  %v1139 = vsub.f32 %v1011, 0.5
  %v1140 = vsub.f32 %v1012, 0.5
  %v1141 = vsub.f32 %v1013, 0.5
  %v1142 = vsub.f32 %v1014, 0.5
  %v1143 = vsub.f32 %v1015, 0.5
  %v1144 = vsub.f32 %v1016, 0.5
  %v1145 = vsub.f32 %v1017, 0.5
  %v1146 = vsub.f32 %v1018, 0.5
  %v1147 = vsub.f32 %v1019, 0.5
  %v1148 = vsub.f32 %v1020, 0.5
  %v1149 = vsub.f32 %v1021, 0.5
  %v1150 = vmul.f32 %v1118, %v1134
  %v1151 = vmul.f32 %v1119, %v1135
  %v1152 = vmul.f32 %v1120, %v1136
  %v1153 = vmul.f32 %v1121, %v1137
  %v1154 = vmul.f32 %v1122, %v1138
  %v1155 = vmul.f32 %v1123, %v1139
  %v1156 = vmul.f32 %v1124, %v1140
  %v1157 = vmul.f32 %v1125, %v1141
  %v1158 = vmul.f32 %v1126, %v1142
  %v1159 = vmul.f32 %v1127, %v1143
  %v1160 = vmul.f32 %v1128, %v1144
  %v1161 = vmul.f32 %v1129, %v1145
  %v1162 = vmul.f32 %v1130, %v1146
  %v1163 = vmul.f32 %v1131, %v1147
  %v1164 = vmul.f32 %v1132, %v1148
  %v1165 = vmul.f32 %v1133, %v1149
  %v1166 = vadd.f32 %v1102, %v1150
  %v1167 = vadd.f32 %v1103, %v1151
  %v1168 = vadd.f32 %v1104, %v1152
  %v1169 = vadd.f32 %v1105, %v1153
  %v1170 = vadd.f32 %v1106, %v1154
  %v1171 = vadd.f32 %v1107, %v1155
  %v1172 = vadd.f32 %v1108, %v1156
  %v1173 = vadd.f32 %v1109, %v1157
  %v1174 = vadd.f32 %v1110, %v1158
  %v1175 = vadd.f32 %v1111, %v1159
  %v1176 = vadd.f32 %v1112, %v1160
  %v1177 = vadd.f32 %v1113, %v1161
  %v1178 = vadd.f32 %v1114, %v1162
  %v1179 = vadd.f32 %v1115, %v1163
  %v1180 = vadd.f32 %v1116, %v1164
  %v1181 = vadd.f32 %v1117, %v1165
  %v1182 = vadd.f32 %v1166, %v1167
  %v1183 = vadd.f32 %v1182, %v1168
  %v1184 = vadd.f32 %v1183, %v1169
  %v1185 = vadd.f32 %v1184, %v1170
  %v1186 = vadd.f32 %v1185, %v1171
  %v1187 = vadd.f32 %v1186, %v1172
  %v1188 = vadd.f32 %v1187, %v1173
  %v1189 = vadd.f32 %v1188, %v1174
  %v1190 = vadd.f32 %v1189, %v1175
  %v1191 = vadd.f32 %v1190, %v1176
  %v1192 = vadd.f32 %v1191, %v1177
  %v1193 = vadd.f32 %v1192, %v1178
  %v1194 = vadd.f32 %v1193, %v1179
  %v1195 = vadd.f32 %v1194, %v1180
  %v1196 = vadd.f32 %v1195, %v1181
  %1197 = vadd.xlane.f32.xlu0 %v1196
  %v1198 = vpop.xlane.xlu0 %1197
  %v1199 = vrot.slane %v1198, 4
  %v1200 = vadd.f32 %v1198, %v1199
  %v1201 = vrot.slane %v1200, 2
  %v1202 = vadd.f32 %v1200, %v1201
  %v1203 = vrot.slane %v1202, 1
  %v1204 = vadd.f32 %v1202, %v1203
  %s1205 = vtos %v1204
  %1206 = vmax.xlane.f32.xlu0 %v845
  %v1207 = vpop.xlane.xlu0 %1206
  %1208 = vmax.xlane.f32.xlu0 %v846
  %v1209 = vpop.xlane.xlu0 %1208
  %1210 = vmax.xlane.f32.xlu0 %v847
  %v1211 = vpop.xlane.xlu0 %1210
  %1212 = vmax.xlane.f32.xlu0 %v848
  %v1213 = vpop.xlane.xlu0 %1212
  %1214 = vmax.xlane.f32.xlu0 %v849
  %v1215 = vpop.xlane.xlu0 %1214
  %1216 = vmax.xlane.f32.xlu0 %v850
  %v1217 = vpop.xlane.xlu0 %1216
  %1218 = vmax.xlane.f32.xlu0 %v851
  %v1219 = vpop.xlane.xlu0 %1218
  %1220 = vmax.xlane.f32.xlu0 %v852
  %v1221 = vpop.xlane.xlu0 %1220
  %1222 = vmax.xlane.f32.xlu0 %v853
  %v1223 = vpop.xlane.xlu0 %1222
  %1224 = vmax.xlane.f32.xlu0 %v854
  %v1225 = vpop.xlane.xlu0 %1224
  %1226 = vmax.xlane.f32.xlu0 %v855
  %v1227 = vpop.xlane.xlu0 %1226
  %1228 = vmax.xlane.f32.xlu0 %v856
  %v1229 = vpop.xlane.xlu0 %1228
  %1230 = vmax.xlane.f32.xlu0 %v857
  %v1231 = vpop.xlane.xlu0 %1230
  %1232 = vmax.xlane.f32.xlu0 %v858
  %v1233 = vpop.xlane.xlu0 %1232
  %1234 = vmax.xlane.f32.xlu0 %v859
  %v1235 = vpop.xlane.xlu0 %1234
  %1236 = vmax.xlane.f32.xlu0 %v860
  %v1237 = vpop.xlane.xlu0 %1236
  %v1238 = vsub.f32 %v845, %v1207
  %v1239 = vsub.f32 %v846, %v1209
  %v1240 = vsub.f32 %v847, %v1211
  %v1241 = vsub.f32 %v848, %v1213
  %v1242 = vsub.f32 %v849, %v1215
  %v1243 = vsub.f32 %v850, %v1217
  %v1244 = vsub.f32 %v851, %v1219
  %v1245 = vsub.f32 %v852, %v1221
  %v1246 = vsub.f32 %v853, %v1223
  %v1247 = vsub.f32 %v854, %v1225
  %v1248 = vsub.f32 %v855, %v1227
  %v1249 = vsub.f32 %v856, %v1229
  %v1250 = vsub.f32 %v857, %v1231
  %v1251 = vsub.f32 %v858, %v1233
  %v1252 = vsub.f32 %v859, %v1235
  %v1253 = vsub.f32 %v860, %v1237
  %v1254 = vmul.f32 %v1238, 1.442695
  %v1255 = vpow.pop %v1254
  %v1256 = vmul.f32 %v1239, 1.442695
  %v1257 = vpow.pop %v1256
  %v1258 = vmul.f32 %v1240, 1.442695
  %v1259 = vpow.pop %v1258
  %v1260 = vmul.f32 %v1241, 1.442695
  %v1261 = vpow.pop %v1260
  %v1262 = vmul.f32 %v1242, 1.442695
  %v1263 = vpow.pop %v1262
  %v1264 = vmul.f32 %v1243, 1.442695
  %v1265 = vpow.pop %v1264
  %v1266 = vmul.f32 %v1244, 1.442695
  %v1267 = vpow.pop %v1266
  %v1268 = vmul.f32 %v1245, 1.442695
  %v1269 = vpow.pop %v1268
  %v1270 = vmul.f32 %v1246, 1.442695
  %v1271 = vpow.pop %v1270
  %v1272 = vmul.f32 %v1247, 1.442695
  %v1273 = vpow.pop %v1272
  %v1274 = vmul.f32 %v1248, 1.442695
  %v1275 = vpow.pop %v1274
  %v1276 = vmul.f32 %v1249, 1.442695
  %v1277 = vpow.pop %v1276
  %v1278 = vmul.f32 %v1250, 1.442695
  %v1279 = vpow.pop %v1278
  %v1280 = vmul.f32 %v1251, 1.442695
  %v1281 = vpow.pop %v1280
  %v1282 = vmul.f32 %v1252, 1.442695
  %v1283 = vpow.pop %v1282
  %v1284 = vmul.f32 %v1253, 1.442695
  %v1285 = vpow.pop %v1284
  %1286 = vadd.xlane.f32.xlu0 %v1255
  %v1287 = vpop.xlane.xlu0 %1286
  %1288 = vadd.xlane.f32.xlu0 %v1257
  %v1289 = vpop.xlane.xlu0 %1288
  %1290 = vadd.xlane.f32.xlu0 %v1259
  %v1291 = vpop.xlane.xlu0 %1290
  %1292 = vadd.xlane.f32.xlu0 %v1261
  %v1293 = vpop.xlane.xlu0 %1292
  %1294 = vadd.xlane.f32.xlu0 %v1263
  %v1295 = vpop.xlane.xlu0 %1294
  %1296 = vadd.xlane.f32.xlu0 %v1265
  %v1297 = vpop.xlane.xlu0 %1296
  %1298 = vadd.xlane.f32.xlu0 %v1267
  %v1299 = vpop.xlane.xlu0 %1298
  %1300 = vadd.xlane.f32.xlu0 %v1269
  %v1301 = vpop.xlane.xlu0 %1300
  %1302 = vadd.xlane.f32.xlu0 %v1271
  %v1303 = vpop.xlane.xlu0 %1302
  %1304 = vadd.xlane.f32.xlu0 %v1273
  %v1305 = vpop.xlane.xlu0 %1304
  %1306 = vadd.xlane.f32.xlu0 %v1275
  %v1307 = vpop.xlane.xlu0 %1306
  %1308 = vadd.xlane.f32.xlu0 %v1277
  %v1309 = vpop.xlane.xlu0 %1308
  %1310 = vadd.xlane.f32.xlu0 %v1279
  %v1311 = vpop.xlane.xlu0 %1310
  %1312 = vadd.xlane.f32.xlu0 %v1281
  %v1313 = vpop.xlane.xlu0 %1312
  %1314 = vadd.xlane.f32.xlu0 %v1283
  %v1315 = vpop.xlane.xlu0 %1314
  %1316 = vadd.xlane.f32.xlu0 %v1285
  %v1317 = vpop.xlane.xlu0 %1316
  %v1318 = vlog2.pop %v1287
  %v1319 = vmul.f32 %v1318, 0.6931472
  %v1320 = vlog2.pop %v1289
  %v1321 = vmul.f32 %v1320, 0.6931472
  %v1322 = vlog2.pop %v1291
  %v1323 = vmul.f32 %v1322, 0.6931472
  %v1324 = vlog2.pop %v1293
  %v1325 = vmul.f32 %v1324, 0.6931472
  %v1326 = vlog2.pop %v1295
  %v1327 = vmul.f32 %v1326, 0.6931472
  %v1328 = vlog2.pop %v1297
  %v1329 = vmul.f32 %v1328, 0.6931472
  %v1330 = vlog2.pop %v1299
  %v1331 = vmul.f32 %v1330, 0.6931472
  %v1332 = vlog2.pop %v1301
  %v1333 = vmul.f32 %v1332, 0.6931472
  %v1334 = vlog2.pop %v1303
  %v1335 = vmul.f32 %v1334, 0.6931472
  %v1336 = vlog2.pop %v1305
  %v1337 = vmul.f32 %v1336, 0.6931472
  %v1338 = vlog2.pop %v1307
  %v1339 = vmul.f32 %v1338, 0.6931472
  %v1340 = vlog2.pop %v1309
  %v1341 = vmul.f32 %v1340, 0.6931472
  %v1342 = vlog2.pop %v1311
  %v1343 = vmul.f32 %v1342, 0.6931472
  %v1344 = vlog2.pop %v1313
  %v1345 = vmul.f32 %v1344, 0.6931472
  %v1346 = vlog2.pop %v1315
  %v1347 = vmul.f32 %v1346, 0.6931472
  %v1348 = vlog2.pop %v1317
  %v1349 = vmul.f32 %v1348, 0.6931472
  %v1350 = vsub.f32 %v1238, %v1319
  %v1351 = vsub.f32 %v1239, %v1321
  %v1352 = vsub.f32 %v1240, %v1323
  %v1353 = vsub.f32 %v1241, %v1325
  %v1354 = vsub.f32 %v1242, %v1327
  %v1355 = vsub.f32 %v1243, %v1329
  %v1356 = vsub.f32 %v1244, %v1331
  %v1357 = vsub.f32 %v1245, %v1333
  %v1358 = vsub.f32 %v1246, %v1335
  %v1359 = vsub.f32 %v1247, %v1337
  %v1360 = vsub.f32 %v1248, %v1339
  %v1361 = vsub.f32 %v1249, %v1341
  %v1362 = vsub.f32 %v1250, %v1343
  %v1363 = vsub.f32 %v1251, %v1345
  %v1364 = vsub.f32 %v1252, %v1347
  %v1365 = vsub.f32 %v1253, %v1349
  %vm1366 = vcmp.eq.s32.totalorder %v479, %v877
  %vm1367 = vcmp.eq.s32.totalorder %v479, %v878
  %vm1368 = vcmp.eq.s32.totalorder %v479, %v879
  %vm1369 = vcmp.eq.s32.totalorder %v479, %v880
  %vm1370 = vcmp.eq.s32.totalorder %v479, %v881
  %vm1371 = vcmp.eq.s32.totalorder %v479, %v882
  %vm1372 = vcmp.eq.s32.totalorder %v479, %v883
  %vm1373 = vcmp.eq.s32.totalorder %v479, %v884
  %vm1374 = vcmp.eq.s32.totalorder %v479, %v885
  %vm1375 = vcmp.eq.s32.totalorder %v479, %v886
  %vm1376 = vcmp.eq.s32.totalorder %v479, %v887
  %vm1377 = vcmp.eq.s32.totalorder %v479, %v888
  %vm1378 = vcmp.eq.s32.totalorder %v479, %v889
  %vm1379 = vcmp.eq.s32.totalorder %v479, %v890
  %vm1380 = vcmp.eq.s32.totalorder %v479, %v891
  %vm1381 = vcmp.eq.s32.totalorder %v479, %v892
  %v1382 = vsel %vm1366, 1, 0
  %v1383 = vsel %vm1367, 1, 0
  %v1384 = vsel %vm1368, 1, 0
  %v1385 = vsel %vm1369, 1, 0
  %v1386 = vsel %vm1370, 1, 0
  %v1387 = vsel %vm1371, 1, 0
  %v1388 = vsel %vm1372, 1, 0
  %v1389 = vsel %vm1373, 1, 0
  %v1390 = vsel %vm1374, 1, 0
  %v1391 = vsel %vm1375, 1, 0
  %v1392 = vsel %vm1376, 1, 0
  %v1393 = vsel %vm1377, 1, 0
  %v1394 = vsel %vm1378, 1, 0
  %v1395 = vsel %vm1379, 1, 0
  %v1396 = vsel %vm1380, 1, 0
  %v1397 = vsel %vm1381, 1, 0
  %v1398 = vcvt.s32.f32 %v1382
  %v1399 = vcvt.s32.f32 %v1383
  %v1400 = vcvt.s32.f32 %v1384
  %v1401 = vcvt.s32.f32 %v1385
  %v1402 = vcvt.s32.f32 %v1386
  %v1403 = vcvt.s32.f32 %v1387
  %v1404 = vcvt.s32.f32 %v1388
  %v1405 = vcvt.s32.f32 %v1389
  %v1406 = vcvt.s32.f32 %v1390
  %v1407 = vcvt.s32.f32 %v1391
  %v1408 = vcvt.s32.f32 %v1392
  %v1409 = vcvt.s32.f32 %v1393
  %v1410 = vcvt.s32.f32 %v1394
  %v1411 = vcvt.s32.f32 %v1395
  %v1412 = vcvt.s32.f32 %v1396
  %v1413 = vcvt.s32.f32 %v1397
  %v1414 = vmul.f32 %v1398, %v1350
  %v1415 = vmul.f32 %v1399, %v1351
  %v1416 = vmul.f32 %v1400, %v1352
  %v1417 = vmul.f32 %v1401, %v1353
  %v1418 = vmul.f32 %v1402, %v1354
  %v1419 = vmul.f32 %v1403, %v1355
  %v1420 = vmul.f32 %v1404, %v1356
  %v1421 = vmul.f32 %v1405, %v1357
  %v1422 = vmul.f32 %v1406, %v1358
  %v1423 = vmul.f32 %v1407, %v1359
  %v1424 = vmul.f32 %v1408, %v1360
  %v1425 = vmul.f32 %v1409, %v1361
  %v1426 = vmul.f32 %v1410, %v1362
  %v1427 = vmul.f32 %v1411, %v1363
  %v1428 = vmul.f32 %v1412, %v1364
  %v1429 = vmul.f32 %v1413, %v1365
  %v1430 = vadd.f32 %v1414, %v1415
  %v1431 = vadd.f32 %v1430, %v1416
  %v1432 = vadd.f32 %v1431, %v1417
  %v1433 = vadd.f32 %v1432, %v1418
  %v1434 = vadd.f32 %v1433, %v1419
  %v1435 = vadd.f32 %v1434, %v1420
  %v1436 = vadd.f32 %v1435, %v1421
  %v1437 = vadd.f32 %v1436, %v1422
  %v1438 = vadd.f32 %v1437, %v1423
  %v1439 = vadd.f32 %v1438, %v1424
  %v1440 = vadd.f32 %v1439, %v1425
  %v1441 = vadd.f32 %v1440, %v1426
  %v1442 = vadd.f32 %v1441, %v1427
  %v1443 = vadd.f32 %v1442, %v1428
  %v1444 = vadd.f32 %v1443, %v1429
  %1445 = vadd.xlane.f32.xlu0 %v1444
  %v1446 = vpop.xlane.xlu0 %1445
  %v1447 = vrot.slane %v1446, 4
  %v1448 = vadd.f32 %v1446, %v1447
  %v1449 = vrot.slane %v1448, 2
  %v1450 = vadd.f32 %v1448, %v1449
  %v1451 = vrot.slane %v1450, 1
  %v1452 = vadd.f32 %v1450, %v1451
  %s1453 = vtos %v1452
  %s1454 = ssub.f32 0.0, %s1453
  %s1455 = smul.f32 %s1205, 0.0078125
  %s1456 = smul.f32 %s1454, 0.0078125
  %s1457 = sadd.f32 %s811, %s812
  %s1458 = sadd.f32 %s1457, %s1455
  %s1459 = sadd.f32 %s1458, %s1456
  %vm1460 = vcmp.eq.s32.totalorder %v479, 0
  %v1461 = vstv %s811
  %v1462 = vsel %vm1460, %v1461, 0.0
  %vm1463 = vcmp.eq.s32.totalorder %v479, 1
  %v1464 = vstv %s812
  %v1465 = vsel %vm1463, %v1464, 0.0
  %v1466 = vadd.f32 %v1462, %v1465
  %vm1467 = vcmp.eq.s32.totalorder %v479, 2
  %v1468 = vstv %s1455
  %v1469 = vsel %vm1467, %v1468, 0.0
  %v1470 = vadd.f32 %v1466, %v1469
  %vm1471 = vcmp.eq.s32.totalorder %v479, 3
  %v1472 = vstv %s1456
  %v1473 = vsel %vm1471, %v1472, 0.0
  %v1474 = vadd.f32 %v1470, %v1473
  %vm1475 = vcmp.eq.s32.totalorder %v479, 4
  %v1476 = vstv %s1459
  %v1477 = vsel %vm1475, %v1476, 0.0
  %v1478 = vadd.f32 %v1474, %v1477
  %1479 = vst [vmem:[%s2] sm:$0x1] %v1478
  // Predicated region
  $region10: #{fused_loss_row.1} parent=0 // pred_check
    _
  $region11: #{fused_loss_row.1} parent=0 // pred_check_branch
    %1481 = sbr.rel (0) target = $region13
  $region12: #{fused_loss_row.1} parent=0 // pred_region
    _
  $region13: #{fused_loss_row.1} parent=0 // pred_fallthru
    _
  // Predicated region
  $region14: #{fused_loss_row.1} parent=0 // pred_check
    _
  $region15: #{fused_loss_row.1} parent=0 // pred_check_branch
    %1483 = sbr.rel (0) target = $region17
  $region16: #{fused_loss_row.1} parent=0 // pred_region
    _
  $region17: #{fused_loss_row.1} parent=0 // pred_fallthru
    _

</llo_original>
